<compile_context>
chip_gen: v7x
topology: tpu7x:2x2x1
jax: 0.10.0
libtpu: 0.0.40
codegen_flags: <defaults>
</compile_context>

<pallas_src>
import jax
import jax.numpy as jnp
from jax import lax
from jax.experimental import pallas as pl
from jax.experimental.pallas import tpu as pltpu

# ---- model config (small, consistent with BartConfig fields used) ----------
B, S, D, H, F = 2, 8, 32, 4, 64       # batch, seq, d_model, heads, ffn_dim
HD = D // H                            # head_dim
BS = B * S
LN_EPS = 1e-5
SCALE = HD ** -0.5


# ----------------------------- Pallas kernel --------------------------------
def bart_encoder_layer_kernel(
    h_ref, mask_ref,
    wqkv_ref, bqkv_ref,
    owT_ref, ob_ref, ln1g_ref, ln1b_ref,
    w1T_ref, b1_ref, w2T_ref, b2_ref, ln2g_ref, ln2b_ref,
    out_ref,
):
    x = h_ref[...]                     # (BS, D)   flattened hidden states
    mask = mask_ref[...]               # (BS, BS)  block-diagonal additive mask

    # ---------------- fused QKV projection (SCALE already folded into q) ----
    qkv = jnp.dot(x, wqkv_ref[...], preferred_element_type=jnp.float32) \
        + bqkv_ref[...]                # (BS, 3D)

    # ---------------- per-head attention (static loop, H=4) -----------------
    ctx_parts = []
    for h in range(H):
        qh = qkv[:, h * HD:(h + 1) * HD]                 # (BS, HD)
        kh = qkv[:, D + h * HD:D + (h + 1) * HD]         # (BS, HD)
        vh = qkv[:, 2 * D + h * HD:2 * D + (h + 1) * HD] # (BS, HD)

        # scores = q @ k^T over the flattened token axis; the block-diagonal
        # mask kills cross-batch terms (exp underflows to exactly 0 in f32).
        s = lax.dot_general(qh, kh, (((1,), (1,)), ((), ())),
                            preferred_element_type=jnp.float32) + mask
        s = s - jnp.max(s, axis=-1, keepdims=True)
        p = jnp.exp(s)
        p = p * pl.reciprocal(jnp.sum(p, axis=-1, keepdims=True), approx=True)

        ctx_parts.append(
            jnp.dot(p, vh, preferred_element_type=jnp.float32))  # (BS, HD)

    ctx = jnp.concatenate(ctx_parts, axis=-1)            # (BS, D) lane concat

    # ---------------- single out-projection (head_mask folded into owT) -----
    attn = jnp.dot(ctx, owT_ref[...], preferred_element_type=jnp.float32) \
         + ob_ref[...]

    # residual + LayerNorm 1 (dropout = identity in eval mode)
    x1 = x + attn
    mu = jnp.mean(x1, axis=-1, keepdims=True)
    var = jnp.mean((x1 - mu) ** 2, axis=-1, keepdims=True)
    x1 = (x1 - mu) * lax.rsqrt(var + LN_EPS) * ln1g_ref[...] + ln1b_ref[...]

    # ---------------- feed-forward (relu) -----------------------------------
    f = jnp.dot(x1, w1T_ref[...], preferred_element_type=jnp.float32) + b1_ref[...]
    f = jnp.maximum(f, 0.0)
    f = jnp.dot(f, w2T_ref[...], preferred_element_type=jnp.float32) + b2_ref[...]

    # residual + LayerNorm 2
    y = x1 + f
    mu = jnp.mean(y, axis=-1, keepdims=True)
    var = jnp.mean((y - mu) ** 2, axis=-1, keepdims=True)
    out_ref[...] = (y - mu) * lax.rsqrt(var + LN_EPS) * ln2g_ref[...] + ln2b_ref[...]


# ------------------------------- wrapper -------------------------------------
def bart_encoder_layer(hidden, attn_mask, head_mask, p):
    h2 = hidden.reshape(BS, D)

    # fold the 1/sqrt(head_dim) scale into the q projection (params only)
    qw_s = p["qw"] * SCALE
    qb_s = p["qb"] * SCALE
    wqkv = jnp.concatenate([qw_s.T, p["kw"].T, p["vw"].T], axis=1)   # (D, 3D)
    bqkv = jnp.concatenate([qb_s, p["kb"], p["vb"]]).reshape(1, 3 * D)

    # fold layer_head_mask (post-softmax, linear in ctx @ O) into out-proj rows
    hm_rows = jnp.repeat(head_mask, HD)                              # (D,)
    owT = p["ow"].T * hm_rows[:, None]                               # (D, D)
    ob = p["ob"].reshape(1, D)

    # block-diagonal additive mask over the flattened (B*S) token axis:
    # cross-batch entries get -1e9 so their softmax weight underflows to 0.
    big_mask = jnp.full((BS, BS), -1e9, jnp.float32)
    for b in range(B):
        big_mask = big_mask.at[b * S:(b + 1) * S, b * S:(b + 1) * S].set(
            attn_mask[b, 0])

    w1T = p["w1"].T                                                  # (D, F)
    w2T = p["w2"].T                                                  # (F, D)
    b1 = p["b1"].reshape(1, F)
    b2 = p["b2"].reshape(1, D)
    ln1g = p["ln1g"].reshape(1, D)
    ln1b = p["ln1b"].reshape(1, D)
    ln2g = p["ln2g"].reshape(1, D)
    ln2b = p["ln2b"].reshape(1, D)

    vspec = lambda shape: pl.BlockSpec(shape, lambda: (0,) * len(shape))

    out = pl.pallas_call(
        bart_encoder_layer_kernel,
        out_shape=jax.ShapeDtypeStruct((BS, D), jnp.float32),
        in_specs=[
            vspec((BS, D)),            # hidden (flattened)
            vspec((BS, BS)),           # block-diagonal additive mask
            vspec((D, 3 * D)), vspec((1, 3 * D)),   # fused QKV
            vspec((D, D)), vspec((1, D)),           # out proj (head_mask folded)
            vspec((1, D)), vspec((1, D)),           # LN1
            vspec((D, F)), vspec((1, F)),           # fc1
            vspec((F, D)), vspec((1, D)),           # fc2
            vspec((1, D)), vspec((1, D)),           # LN2
        ],
        out_specs=vspec((BS, D)),
    )(h2, big_mask, wqkv, bqkv, owT, ob, ln1g, ln1b,
      w1T, b1, w2T, b2, ln2g, ln2b)

    # TODO(synk): out_spec kept as (B*S, D)=(16,32) rather than a lane-dense
    # (B, S*D) slab — the in-kernel relayout would cost more than the masked
    # store it removes at this toy size.
    return out.reshape(B, S, D)


# --------------------------- pure-JAX reference -------------------------------
def _layer_norm(x, g, b):
    mu = jnp.mean(x, axis=-1, keepdims=True)
    var = jnp.mean((x - mu) ** 2, axis=-1, keepdims=True)
    return (x - mu) * lax.rsqrt(var + LN_EPS) * g + b


def ref_bart_encoder_layer(x, mask, head_mask, p):
    lin = lambda z, w, b: z @ w.T + b
    q = lin(x, p["qw"], p["qb"]) * SCALE
    k = lin(x, p["kw"], p["kb"])
    v = lin(x, p["vw"], p["vb"])
    split = lambda z: z.reshape(B, S, H, HD).transpose(0, 2, 1, 3)
    q, k, v = split(q), split(k), split(v)
    scores = jnp.einsum("bhqd,bhkd->bhqk", q, k) + mask
    w = jax.nn.softmax(scores, axis=-1) * head_mask[None, :, None, None]
    a = jnp.einsum("bhqk,bhkd->bhqd", w, v).transpose(0, 2, 1, 3).reshape(B, S, D)
    a = lin(a, p["ow"], p["ob"])
    x1 = _layer_norm(x + a, p["ln1g"], p["ln1b"])
    f = jnp.maximum(lin(x1, p["w1"], p["b1"]), 0.0)
    f = lin(f, p["w2"], p["b2"])
    return _layer_norm(x1 + f, p["ln2g"], p["ln2b"])


# --------------------------------- main ---------------------------------------
if __name__ == "__main__":
    key = jax.random.PRNGKey(0)
    keys = jax.random.split(key, 16)

    def nrm(k, shape, s=0.02):
        return (s * jax.random.normal(k, shape)).astype(jnp.float32)

    params = {
        "qw": nrm(keys[0], (D, D)), "qb": nrm(keys[1], (D,)),
        "kw": nrm(keys[2], (D, D)), "kb": nrm(keys[3], (D,)),
        "vw": nrm(keys[4], (D, D)), "vb": nrm(keys[5], (D,)),
        "ow": nrm(keys[6], (D, D)), "ob": nrm(keys[7], (D,)),
        "ln1g": 1.0 + nrm(keys[8], (D,), 0.1), "ln1b": nrm(keys[9], (D,), 0.05),
        "w1": nrm(keys[10], (F, D)), "b1": nrm(keys[11], (F,)),
        "w2": nrm(keys[12], (D, F)), "b2": nrm(keys[13], (D,)),
        "ln2g": 1.0 + nrm(keys[14], (D,), 0.1), "ln2b": nrm(keys[15], (D,), 0.05),
    }

    hk = jax.random.split(jax.random.PRNGKey(1), 2)
    hidden = jax.random.normal(hk[0], (B, S, D), jnp.float32)
    # additive mask: batch 1 masks out the last two key positions
    attn_mask = jnp.zeros((B, 1, S, S), jnp.float32)
    attn_mask = attn_mask.at[1, 0, :, S - 2:].set(-1e9)
    head_mask = jnp.array([1.0, 0.75, 0.5, 1.0], jnp.float32)

    out = bart_encoder_layer(hidden, attn_mask, head_mask, params)
    out = jax.block_until_ready(out)

    ref = ref_bart_encoder_layer(hidden, attn_mask, head_mask, params)
    assert out.shape == (B, S, D)
    # tolerance accounts for the approximate (EUP) reciprocal in the softmax
    assert jnp.allclose(out, ref, rtol=1e-3, atol=1e-3), (
        f"max err {jnp.max(jnp.abs(out - ref))}")

    # TODO(synk): the float16 inf/nan clamp branch is dead for float32 inputs
    # and is intentionally omitted.
    print("KERNEL_OK")
</pallas_src>

<mosaic_0001>
module attributes {stable_mosaic.version = 11 : i64} {
  func.func @bart_encoder_layer_kernel(%arg0: memref<16x32xf32, #tpu.memory_space<vmem>>, %arg1: memref<16x16xf32, #tpu.memory_space<vmem>>, %arg2: memref<32x96xf32, #tpu.memory_space<vmem>>, %arg3: memref<1x96xf32, #tpu.memory_space<vmem>>, %arg4: memref<32x32xf32, #tpu.memory_space<vmem>>, %arg5: memref<1x32xf32, #tpu.memory_space<vmem>>, %arg6: memref<1x32xf32, #tpu.memory_space<vmem>>, %arg7: memref<1x32xf32, #tpu.memory_space<vmem>>, %arg8: memref<32x64xf32, #tpu.memory_space<vmem>>, %arg9: memref<1x64xf32, #tpu.memory_space<vmem>>, %arg10: memref<64x32xf32, #tpu.memory_space<vmem>>, %arg11: memref<1x32xf32, #tpu.memory_space<vmem>>, %arg12: memref<1x32xf32, #tpu.memory_space<vmem>>, %arg13: memref<1x32xf32, #tpu.memory_space<vmem>>, %arg14: memref<16x32xf32, #tpu.memory_space<vmem>>) attributes {dimension_semantics = [], scalar_prefetch = 0 : i64, scratch_operands = 0 : i64, tpu.core_type = #tpu.core_type<tc>} {
    %c0 = arith.constant 0 : index
    %c0_0 = arith.constant 0 : index
    %0 = vector.load %arg0[%c0, %c0_0] : memref<16x32xf32, #tpu.memory_space<vmem>>, vector<16x32xf32>
    %c0_1 = arith.constant 0 : index
    %c0_2 = arith.constant 0 : index
    %1 = vector.load %arg1[%c0_1, %c0_2] : memref<16x16xf32, #tpu.memory_space<vmem>>, vector<16x16xf32>
    %c0_3 = arith.constant 0 : index
    %c0_4 = arith.constant 0 : index
    %2 = vector.load %arg2[%c0_3, %c0_4] : memref<32x96xf32, #tpu.memory_space<vmem>>, vector<32x96xf32>
    %cst = arith.constant dense<0.000000e+00> : vector<16x96xf32>
    %3 = tpu.matmul %0, %2, %cst {dimension_numbers = #tpu.dot_dimension_numbers<[1], [0], [0], [1], [0, 0, 1, 1], [], []>} : vector<16x32xf32>, vector<32x96xf32>, vector<16x96xf32> -> vector<16x96xf32>
    %c0_5 = arith.constant 0 : index
    %c0_6 = arith.constant 0 : index
    %4 = vector.load %arg3[%c0_5, %c0_6] : memref<1x96xf32, #tpu.memory_space<vmem>>, vector<1x96xf32>
    %5 = vector.broadcast %4 : vector<1x96xf32> to vector<16x96xf32>
    %6 = arith.addf %3, %5 : vector<16x96xf32>
    %7 = vector.extract_strided_slice %6 {offsets = [0, 0], sizes = [16, 8], strides = [1, 1]} : vector<16x96xf32> to vector<16x8xf32>
    %8 = vector.extract_strided_slice %6 {offsets = [0, 32], sizes = [16, 8], strides = [1, 1]} : vector<16x96xf32> to vector<16x8xf32>
    %9 = vector.extract_strided_slice %6 {offsets = [0, 64], sizes = [16, 8], strides = [1, 1]} : vector<16x96xf32> to vector<16x8xf32>
    %cst_7 = arith.constant dense<0.000000e+00> : vector<16x16xf32>
    %10 = tpu.matmul %7, %8, %cst_7 {dimension_numbers = #tpu.dot_dimension_numbers<[1], [1], [0], [0], [0, 0, 1, 0], [], []>} : vector<16x8xf32>, vector<16x8xf32>, vector<16x16xf32> -> vector<16x16xf32>
    %11 = arith.addf %10, %1 : vector<16x16xf32>
    %cst_8 = arith.constant dense<0xFF800000> : vector<16xf32>
    %12 = vector.multi_reduction <maximumf>, %11, %cst_8 [1] : vector<16x16xf32> to vector<16xf32>
    %13 = vector.shape_cast %12 : vector<16xf32> to vector<16x1xf32>
    %14 = vector.broadcast %13 : vector<16x1xf32> to vector<16x16xf32>
    %15 = arith.subf %11, %14 : vector<16x16xf32>
    %16 = math.exp %15 : vector<16x16xf32>
    %cst_9 = arith.constant dense<0.000000e+00> : vector<16xf32>
    %17 = vector.multi_reduction <add>, %16, %cst_9 [1] : vector<16x16xf32> to vector<16xf32>
    %18 = vector.shape_cast %17 : vector<16xf32> to vector<16x1xf32>
    %19 = tpu.reciprocal %18 {approx = true} : vector<16x1xf32> -> vector<16x1xf32>
    %20 = vector.broadcast %19 : vector<16x1xf32> to vector<16x16xf32>
    %21 = arith.mulf %16, %20 : vector<16x16xf32>
    %cst_10 = arith.constant dense<0.000000e+00> : vector<16x8xf32>
    %22 = tpu.matmul %21, %9, %cst_10 {dimension_numbers = #tpu.dot_dimension_numbers<[1], [0], [0], [1], [0, 0, 1, 1], [], []>} : vector<16x16xf32>, vector<16x8xf32>, vector<16x8xf32> -> vector<16x8xf32>
    %23 = vector.extract_strided_slice %6 {offsets = [0, 8], sizes = [16, 8], strides = [1, 1]} : vector<16x96xf32> to vector<16x8xf32>
    %24 = vector.extract_strided_slice %6 {offsets = [0, 40], sizes = [16, 8], strides = [1, 1]} : vector<16x96xf32> to vector<16x8xf32>
    %25 = vector.extract_strided_slice %6 {offsets = [0, 72], sizes = [16, 8], strides = [1, 1]} : vector<16x96xf32> to vector<16x8xf32>
    %cst_11 = arith.constant dense<0.000000e+00> : vector<16x16xf32>
    %26 = tpu.matmul %23, %24, %cst_11 {dimension_numbers = #tpu.dot_dimension_numbers<[1], [1], [0], [0], [0, 0, 1, 0], [], []>} : vector<16x8xf32>, vector<16x8xf32>, vector<16x16xf32> -> vector<16x16xf32>
    %27 = arith.addf %26, %1 : vector<16x16xf32>
    %cst_12 = arith.constant dense<0xFF800000> : vector<16xf32>
    %28 = vector.multi_reduction <maximumf>, %27, %cst_12 [1] : vector<16x16xf32> to vector<16xf32>
    %29 = vector.shape_cast %28 : vector<16xf32> to vector<16x1xf32>
    %30 = vector.broadcast %29 : vector<16x1xf32> to vector<16x16xf32>
    %31 = arith.subf %27, %30 : vector<16x16xf32>
    %32 = math.exp %31 : vector<16x16xf32>
    %cst_13 = arith.constant dense<0.000000e+00> : vector<16xf32>
    %33 = vector.multi_reduction <add>, %32, %cst_13 [1] : vector<16x16xf32> to vector<16xf32>
    %34 = vector.shape_cast %33 : vector<16xf32> to vector<16x1xf32>
    %35 = tpu.reciprocal %34 {approx = true} : vector<16x1xf32> -> vector<16x1xf32>
    %36 = vector.broadcast %35 : vector<16x1xf32> to vector<16x16xf32>
    %37 = arith.mulf %32, %36 : vector<16x16xf32>
    %cst_14 = arith.constant dense<0.000000e+00> : vector<16x8xf32>
    %38 = tpu.matmul %37, %25, %cst_14 {dimension_numbers = #tpu.dot_dimension_numbers<[1], [0], [0], [1], [0, 0, 1, 1], [], []>} : vector<16x16xf32>, vector<16x8xf32>, vector<16x8xf32> -> vector<16x8xf32>
    %39 = vector.extract_strided_slice %6 {offsets = [0, 16], sizes = [16, 8], strides = [1, 1]} : vector<16x96xf32> to vector<16x8xf32>
    %40 = vector.extract_strided_slice %6 {offsets = [0, 48], sizes = [16, 8], strides = [1, 1]} : vector<16x96xf32> to vector<16x8xf32>
    %41 = vector.extract_strided_slice %6 {offsets = [0, 80], sizes = [16, 8], strides = [1, 1]} : vector<16x96xf32> to vector<16x8xf32>
    %cst_15 = arith.constant dense<0.000000e+00> : vector<16x16xf32>
    %42 = tpu.matmul %39, %40, %cst_15 {dimension_numbers = #tpu.dot_dimension_numbers<[1], [1], [0], [0], [0, 0, 1, 0], [], []>} : vector<16x8xf32>, vector<16x8xf32>, vector<16x16xf32> -> vector<16x16xf32>
    %43 = arith.addf %42, %1 : vector<16x16xf32>
    %cst_16 = arith.constant dense<0xFF800000> : vector<16xf32>
    %44 = vector.multi_reduction <maximumf>, %43, %cst_16 [1] : vector<16x16xf32> to vector<16xf32>
    %45 = vector.shape_cast %44 : vector<16xf32> to vector<16x1xf32>
    %46 = vector.broadcast %45 : vector<16x1xf32> to vector<16x16xf32>
    %47 = arith.subf %43, %46 : vector<16x16xf32>
    %48 = math.exp %47 : vector<16x16xf32>
    %cst_17 = arith.constant dense<0.000000e+00> : vector<16xf32>
    %49 = vector.multi_reduction <add>, %48, %cst_17 [1] : vector<16x16xf32> to vector<16xf32>
    %50 = vector.shape_cast %49 : vector<16xf32> to vector<16x1xf32>
    %51 = tpu.reciprocal %50 {approx = true} : vector<16x1xf32> -> vector<16x1xf32>
    %52 = vector.broadcast %51 : vector<16x1xf32> to vector<16x16xf32>
    %53 = arith.mulf %48, %52 : vector<16x16xf32>
    %cst_18 = arith.constant dense<0.000000e+00> : vector<16x8xf32>
    %54 = tpu.matmul %53, %41, %cst_18 {dimension_numbers = #tpu.dot_dimension_numbers<[1], [0], [0], [1], [0, 0, 1, 1], [], []>} : vector<16x16xf32>, vector<16x8xf32>, vector<16x8xf32> -> vector<16x8xf32>
    %55 = vector.extract_strided_slice %6 {offsets = [0, 24], sizes = [16, 8], strides = [1, 1]} : vector<16x96xf32> to vector<16x8xf32>
    %56 = vector.extract_strided_slice %6 {offsets = [0, 56], sizes = [16, 8], strides = [1, 1]} : vector<16x96xf32> to vector<16x8xf32>
    %57 = vector.extract_strided_slice %6 {offsets = [0, 88], sizes = [16, 8], strides = [1, 1]} : vector<16x96xf32> to vector<16x8xf32>
    %cst_19 = arith.constant dense<0.000000e+00> : vector<16x16xf32>
    %58 = tpu.matmul %55, %56, %cst_19 {dimension_numbers = #tpu.dot_dimension_numbers<[1], [1], [0], [0], [0, 0, 1, 0], [], []>} : vector<16x8xf32>, vector<16x8xf32>, vector<16x16xf32> -> vector<16x16xf32>
    %59 = arith.addf %58, %1 : vector<16x16xf32>
    %cst_20 = arith.constant dense<0xFF800000> : vector<16xf32>
    %60 = vector.multi_reduction <maximumf>, %59, %cst_20 [1] : vector<16x16xf32> to vector<16xf32>
    %61 = vector.shape_cast %60 : vector<16xf32> to vector<16x1xf32>
    %62 = vector.broadcast %61 : vector<16x1xf32> to vector<16x16xf32>
    %63 = arith.subf %59, %62 : vector<16x16xf32>
    %64 = math.exp %63 : vector<16x16xf32>
    %cst_21 = arith.constant dense<0.000000e+00> : vector<16xf32>
    %65 = vector.multi_reduction <add>, %64, %cst_21 [1] : vector<16x16xf32> to vector<16xf32>
    %66 = vector.shape_cast %65 : vector<16xf32> to vector<16x1xf32>
    %67 = tpu.reciprocal %66 {approx = true} : vector<16x1xf32> -> vector<16x1xf32>
    %68 = vector.broadcast %67 : vector<16x1xf32> to vector<16x16xf32>
    %69 = arith.mulf %64, %68 : vector<16x16xf32>
    %cst_22 = arith.constant dense<0.000000e+00> : vector<16x8xf32>
    %70 = tpu.matmul %69, %57, %cst_22 {dimension_numbers = #tpu.dot_dimension_numbers<[1], [0], [0], [1], [0, 0, 1, 1], [], []>} : vector<16x16xf32>, vector<16x8xf32>, vector<16x8xf32> -> vector<16x8xf32>
    %71 = tpu.concatenate %22, %38, %54, %70 in 1 : vector<16x8xf32>, vector<16x8xf32>, vector<16x8xf32>, vector<16x8xf32> -> vector<16x32xf32>
    %c0_23 = arith.constant 0 : index
    %c0_24 = arith.constant 0 : index
    %72 = vector.load %arg4[%c0_23, %c0_24] : memref<32x32xf32, #tpu.memory_space<vmem>>, vector<32x32xf32>
    %cst_25 = arith.constant dense<0.000000e+00> : vector<16x32xf32>
    %73 = tpu.matmul %71, %72, %cst_25 {dimension_numbers = #tpu.dot_dimension_numbers<[1], [0], [0], [1], [0, 0, 1, 1], [], []>} : vector<16x32xf32>, vector<32x32xf32>, vector<16x32xf32> -> vector<16x32xf32>
    %c0_26 = arith.constant 0 : index
    %c0_27 = arith.constant 0 : index
    %74 = vector.load %arg5[%c0_26, %c0_27] : memref<1x32xf32, #tpu.memory_space<vmem>>, vector<1x32xf32>
    %75 = vector.broadcast %74 : vector<1x32xf32> to vector<16x32xf32>
    %76 = arith.addf %73, %75 : vector<16x32xf32>
    %77 = arith.addf %0, %76 : vector<16x32xf32>
    %cst_28 = arith.constant dense<0.000000e+00> : vector<16xf32>
    %78 = vector.multi_reduction <add>, %77, %cst_28 [1] : vector<16x32xf32> to vector<16xf32>
    %79 = vector.shape_cast %78 : vector<16xf32> to vector<16x1xf32>
    %cst_29 = arith.constant 3.200000e+01 : f32
    %80 = vector.broadcast %cst_29 : f32 to vector<16x1xf32>
    %81 = arith.divf %79, %80 : vector<16x1xf32>
    %82 = vector.broadcast %81 : vector<16x1xf32> to vector<16x32xf32>
    %83 = arith.subf %77, %82 : vector<16x32xf32>
    %84 = arith.mulf %83, %83 : vector<16x32xf32>
    %cst_30 = arith.constant dense<0.000000e+00> : vector<16xf32>
    %85 = vector.multi_reduction <add>, %84, %cst_30 [1] : vector<16x32xf32> to vector<16xf32>
    %86 = vector.shape_cast %85 : vector<16xf32> to vector<16x1xf32>
    %cst_31 = arith.constant 3.200000e+01 : f32
    %87 = vector.broadcast %cst_31 : f32 to vector<16x1xf32>
    %88 = arith.divf %86, %87 : vector<16x1xf32>
    %89 = vector.broadcast %81 : vector<16x1xf32> to vector<16x32xf32>
    %90 = arith.subf %77, %89 : vector<16x32xf32>
    %cst_32 = arith.constant 9.99999974E-6 : f32
    %91 = vector.broadcast %cst_32 : f32 to vector<16x1xf32>
    %92 = arith.addf %88, %91 : vector<16x1xf32>
    %93 = math.rsqrt %92 : vector<16x1xf32>
    %94 = vector.broadcast %93 : vector<16x1xf32> to vector<16x32xf32>
    %95 = arith.mulf %90, %94 : vector<16x32xf32>
    %c0_33 = arith.constant 0 : index
    %c0_34 = arith.constant 0 : index
    %96 = vector.load %arg6[%c0_33, %c0_34] : memref<1x32xf32, #tpu.memory_space<vmem>>, vector<1x32xf32>
    %97 = vector.broadcast %96 : vector<1x32xf32> to vector<16x32xf32>
    %98 = arith.mulf %95, %97 : vector<16x32xf32>
    %c0_35 = arith.constant 0 : index
    %c0_36 = arith.constant 0 : index
    %99 = vector.load %arg7[%c0_35, %c0_36] : memref<1x32xf32, #tpu.memory_space<vmem>>, vector<1x32xf32>
    %100 = vector.broadcast %99 : vector<1x32xf32> to vector<16x32xf32>
    %101 = arith.addf %98, %100 : vector<16x32xf32>
    %c0_37 = arith.constant 0 : index
    %c0_38 = arith.constant 0 : index
    %102 = vector.load %arg8[%c0_37, %c0_38] : memref<32x64xf32, #tpu.memory_space<vmem>>, vector<32x64xf32>
    %cst_39 = arith.constant dense<0.000000e+00> : vector<16x64xf32>
    %103 = tpu.matmul %101, %102, %cst_39 {dimension_numbers = #tpu.dot_dimension_numbers<[1], [0], [0], [1], [0, 0, 1, 1], [], []>} : vector<16x32xf32>, vector<32x64xf32>, vector<16x64xf32> -> vector<16x64xf32>
    %c0_40 = arith.constant 0 : index
    %c0_41 = arith.constant 0 : index
    %104 = vector.load %arg9[%c0_40, %c0_41] : memref<1x64xf32, #tpu.memory_space<vmem>>, vector<1x64xf32>
    %105 = vector.broadcast %104 : vector<1x64xf32> to vector<16x64xf32>
    %106 = arith.addf %103, %105 : vector<16x64xf32>
    %cst_42 = arith.constant 0.000000e+00 : f32
    %107 = vector.broadcast %cst_42 : f32 to vector<16x64xf32>
    %108 = arith.maximumf %106, %107 : vector<16x64xf32>
    %c0_43 = arith.constant 0 : index
    %c0_44 = arith.constant 0 : index
    %109 = vector.load %arg10[%c0_43, %c0_44] : memref<64x32xf32, #tpu.memory_space<vmem>>, vector<64x32xf32>
    %cst_45 = arith.constant dense<0.000000e+00> : vector<16x32xf32>
    %110 = tpu.matmul %108, %109, %cst_45 {dimension_numbers = #tpu.dot_dimension_numbers<[1], [0], [0], [1], [0, 0, 1, 1], [], []>} : vector<16x64xf32>, vector<64x32xf32>, vector<16x32xf32> -> vector<16x32xf32>
    %c0_46 = arith.constant 0 : index
    %c0_47 = arith.constant 0 : index
    %111 = vector.load %arg11[%c0_46, %c0_47] : memref<1x32xf32, #tpu.memory_space<vmem>>, vector<1x32xf32>
    %112 = vector.broadcast %111 : vector<1x32xf32> to vector<16x32xf32>
    %113 = arith.addf %110, %112 : vector<16x32xf32>
    %114 = arith.addf %101, %113 : vector<16x32xf32>
    %cst_48 = arith.constant dense<0.000000e+00> : vector<16xf32>
    %115 = vector.multi_reduction <add>, %114, %cst_48 [1] : vector<16x32xf32> to vector<16xf32>
    %116 = vector.shape_cast %115 : vector<16xf32> to vector<16x1xf32>
    %cst_49 = arith.constant 3.200000e+01 : f32
    %117 = vector.broadcast %cst_49 : f32 to vector<16x1xf32>
    %118 = arith.divf %116, %117 : vector<16x1xf32>
    %119 = vector.broadcast %118 : vector<16x1xf32> to vector<16x32xf32>
    %120 = arith.subf %114, %119 : vector<16x32xf32>
    %121 = arith.mulf %120, %120 : vector<16x32xf32>
    %cst_50 = arith.constant dense<0.000000e+00> : vector<16xf32>
    %122 = vector.multi_reduction <add>, %121, %cst_50 [1] : vector<16x32xf32> to vector<16xf32>
    %123 = vector.shape_cast %122 : vector<16xf32> to vector<16x1xf32>
    %cst_51 = arith.constant 3.200000e+01 : f32
    %124 = vector.broadcast %cst_51 : f32 to vector<16x1xf32>
    %125 = arith.divf %123, %124 : vector<16x1xf32>
    %126 = vector.broadcast %118 : vector<16x1xf32> to vector<16x32xf32>
    %127 = arith.subf %114, %126 : vector<16x32xf32>
    %cst_52 = arith.constant 9.99999974E-6 : f32
    %128 = vector.broadcast %cst_52 : f32 to vector<16x1xf32>
    %129 = arith.addf %125, %128 : vector<16x1xf32>
    %130 = math.rsqrt %129 : vector<16x1xf32>
    %131 = vector.broadcast %130 : vector<16x1xf32> to vector<16x32xf32>
    %132 = arith.mulf %127, %131 : vector<16x32xf32>
    %c0_53 = arith.constant 0 : index
    %c0_54 = arith.constant 0 : index
    %133 = vector.load %arg12[%c0_53, %c0_54] : memref<1x32xf32, #tpu.memory_space<vmem>>, vector<1x32xf32>
    %134 = vector.broadcast %133 : vector<1x32xf32> to vector<16x32xf32>
    %135 = arith.mulf %132, %134 : vector<16x32xf32>
    %c0_55 = arith.constant 0 : index
    %c0_56 = arith.constant 0 : index
    %136 = vector.load %arg13[%c0_55, %c0_56] : memref<1x32xf32, #tpu.memory_space<vmem>>, vector<1x32xf32>
    %137 = vector.broadcast %136 : vector<1x32xf32> to vector<16x32xf32>
    %138 = arith.addf %135, %137 : vector<16x32xf32>
    %c0_57 = arith.constant 0 : index
    %c0_58 = arith.constant 0 : index
    %139 = vector.load %arg14[%c0_57, %c0_58] : memref<16x32xf32, #tpu.memory_space<vmem>>, vector<16x32xf32>
    tpu.vector_store %arg14[%c0_57, %c0_58], %138 {strides = array<i32>} : memref<16x32xf32, #tpu.memory_space<vmem>>, vector<16x32xf32>,
    return
  }
}

</mosaic_0001>

<llo_original>
// kernel: tpu_custom_call.1
$region0: #{tpu_custom_call.1}
  #allocation0 [shape = 'u32[]', space=smem, size = 0x4, offset = 0x4, fixed_abs, tag = 'smem constant byte address 0x4 - core index']
  #allocation1 [shape = 'u32[144,128]{1,0:T(1,128)}', space=vmem, size = 0x12000, scoped, tag = 'internal scratch']
  %s0 = inlined_call_operand.hbm [shape: f32[16,32], index: 0, kind: input, shape index: {}]
  %s1 = inlined_call_operand.hbm [shape: f32[16,16], index: 1, kind: input, shape index: {}]
  %s2 = inlined_call_operand.vmem [shape: f32[32,96], index: 2, kind: input, shape index: {}]
  %s3 = inlined_call_operand.vmem [shape: f32[1,96], index: 3, kind: input, shape index: {}]
  %s4 = inlined_call_operand.vmem [shape: f32[32,32], index: 4, kind: input, shape index: {}]
  %s5 = inlined_call_operand.vmem [shape: f32[1,32], index: 5, kind: input, shape index: {}]
  %s6 = inlined_call_operand.vmem [shape: f32[1,32], index: 6, kind: input, shape index: {}]
  %s7 = inlined_call_operand.vmem [shape: f32[1,32], index: 7, kind: input, shape index: {}]
  %s8 = inlined_call_operand.vmem [shape: f32[32,64], index: 8, kind: input, shape index: {}]
  %s9 = inlined_call_operand.vmem [shape: f32[1,64], index: 9, kind: input, shape index: {}]
  %s10 = inlined_call_operand.vmem [shape: f32[64,32], index: 10, kind: input, shape index: {}]
  %s11 = inlined_call_operand.vmem [shape: f32[1,32], index: 11, kind: input, shape index: {}]
  %s12 = inlined_call_operand.vmem [shape: f32[1,32], index: 12, kind: input, shape index: {}]
  %s13 = inlined_call_operand.vmem [shape: f32[1,32], index: 13, kind: input, shape index: {}]
  %s14 = inlined_call_operand.hbm [shape: f32[16,32], index: 14, kind: output, shape index: {}]
  %s15 = sld [smem:[#allocation0]]
  $region74: #{tpu_custom_call.1} parent=0
    _
  %s17 = ssub.s32 1, %s15
  %s18 = scalar_select 0, %s17, %s15
  $region1: #{tpu_custom_call.1} parent=0
    #allocation2 [shape = 'u8[8192]{0}', space=vmem, size = 0x2000, scoped, tag = 'input window, operand 0, single buffered']
    #allocation3 [shape = 's32[1]{0}', space=sflag, size = 0x4, scoped, tag = 'scoped memory for tpu_custom_call.1']
    #allocation4 [shape = 's32[1]{0}', space=sflag, size = 0x4, scoped, tag = 'scoped memory for tpu_custom_call.1']
    #allocation5 [shape = 'u8[8192]{0}', space=vmem, size = 0x2000, scoped, tag = 'input window, operand 1, single buffered']
    #allocation6 [shape = 's32[1]{0}', space=sflag, size = 0x4, scoped, tag = 'scoped memory for tpu_custom_call.1']
    #allocation7 [shape = 'u8[8192]{0}', space=vmem, size = 0x2000, scoped, tag = 'output window, operand 0, single buffered']
    %19 = vsyncpa [#allocation3], 0
    %20 = vsyncpa [#allocation6], 0
    %21 = vsyncpa [#allocation4], 0
    // Predicated region
    $region2: #{tpu_custom_call.1} parent=1 // pred_check
      _
    $region3: #{tpu_custom_call.1} parent=1 // pred_check_branch
      %23 = sbr.rel (0) target = $region5
    $region4: #{tpu_custom_call.1} parent=1 // pred_region
      %s25 = ssub.s32 256, 256
      %26 = vsyncadd [#allocation3], %s25
      %s27 = sshll.u32 [#allocation2], 4
      %s28 = int_to_ptr.vmem [resolvable:$true] %s27
      %33 = dma.hbm_to_vmem [thread:$0]  %s0, 256, %s28, [#allocation3], 128, 128, 8
    $region5: #{tpu_custom_call.1} parent=1 // pred_fallthru
      _
    // Predicated region
    $region6: #{tpu_custom_call.1} parent=1 // pred_check
      _
    $region7: #{tpu_custom_call.1} parent=1 // pred_check_branch
      %35 = sbr.rel (0) target = $region9
    $region8: #{tpu_custom_call.1} parent=1 // pred_region
      %s37 = ssub.s32 256, 256
      %38 = vsyncadd [#allocation6], %s37
      %s39 = sshll.u32 [#allocation5], 4
      %s40 = int_to_ptr.vmem [resolvable:$true] %s39
      %45 = dma.hbm_to_vmem [thread:$0]  %s1, 256, %s40, [#allocation6], 128, 128, 8
    $region9: #{tpu_custom_call.1} parent=1 // pred_fallthru
      _
    // Predicated region
    $region10: #{tpu_custom_call.1} parent=1 // pred_check
      _
    $region11: #{tpu_custom_call.1} parent=1 // pred_check_branch
      %47 = sbr.rel (0) target = $region13
    $region12: #{tpu_custom_call.1} parent=1 // pred_region
      _
    $region13: #{tpu_custom_call.1} parent=1 // pred_fallthru
      _
    // Predicated region
    $region14: #{tpu_custom_call.1} parent=1 // pred_check
      _
    $region15: #{tpu_custom_call.1} parent=1 // pred_check_branch
      %49 = sbr.rel (0) target = $region17
    $region16: #{tpu_custom_call.1} parent=1 // pred_region
      _
    $region17: #{tpu_custom_call.1} parent=1 // pred_fallthru
      _
    // Predicated region
    $region18: #{tpu_custom_call.1} parent=1 // pred_check
      _
    $region19: #{tpu_custom_call.1} parent=1 // pred_check_branch
      %51 = sbr.rel (0) target = $region21
    $region20: #{tpu_custom_call.1} parent=1 // pred_region
      _
    $region21: #{tpu_custom_call.1} parent=1 // pred_fallthru
      _
    // Predicated region
    $region22: #{tpu_custom_call.1} parent=1 // pred_check
      _
    $region23: #{tpu_custom_call.1} parent=1 // pred_check_branch
      %53 = sbr.rel (0) target = $region25
    $region24: #{tpu_custom_call.1} parent=1 // pred_region
      _
    $region25: #{tpu_custom_call.1} parent=1 // pred_fallthru
      _
    // Predicated region
    $region26: #{tpu_custom_call.1} parent=1 // pred_check
      _
    $region27: #{tpu_custom_call.1} parent=1 // pred_check_branch
      %55 = sbr.rel (0) target = $region29
    $region28: #{tpu_custom_call.1} parent=1 // pred_region
      _
    $region29: #{tpu_custom_call.1} parent=1 // pred_fallthru
      _
    // Predicated region
    $region30: #{tpu_custom_call.1} parent=1 // pred_check
      _
    $region31: #{tpu_custom_call.1} parent=1 // pred_check_branch
      %57 = sbr.rel (0) target = $region33
    $region32: #{tpu_custom_call.1} parent=1 // pred_region
      _
    $region33: #{tpu_custom_call.1} parent=1 // pred_fallthru
      _
    // Predicated region
    $region34: #{tpu_custom_call.1} parent=1 // pred_check
      _
    $region35: #{tpu_custom_call.1} parent=1 // pred_check_branch
      %59 = sbr.rel (0) target = $region37
    $region36: #{tpu_custom_call.1} parent=1 // pred_region
      _
    $region37: #{tpu_custom_call.1} parent=1 // pred_fallthru
      _
    // Predicated region
    $region38: #{tpu_custom_call.1} parent=1 // pred_check
      _
    $region39: #{tpu_custom_call.1} parent=1 // pred_check_branch
      %61 = sbr.rel (0) target = $region41
    $region40: #{tpu_custom_call.1} parent=1 // pred_region
      _
    $region41: #{tpu_custom_call.1} parent=1 // pred_fallthru
      _
    // Predicated region
    $region42: #{tpu_custom_call.1} parent=1 // pred_check
      _
    $region43: #{tpu_custom_call.1} parent=1 // pred_check_branch
      %63 = sbr.rel (0) target = $region45
    $region44: #{tpu_custom_call.1} parent=1 // pred_region
      _
    $region45: #{tpu_custom_call.1} parent=1 // pred_fallthru
      _
    // Predicated region
    $region46: #{tpu_custom_call.1} parent=1 // pred_check
      _
    $region47: #{tpu_custom_call.1} parent=1 // pred_check_branch
      %65 = sbr.rel (0) target = $region49
    $region48: #{tpu_custom_call.1} parent=1 // pred_region
      _
    $region49: #{tpu_custom_call.1} parent=1 // pred_fallthru
      _
    // Predicated region
    $region50: #{tpu_custom_call.1} parent=1 // pred_check
      _
    $region51: #{tpu_custom_call.1} parent=1 // pred_check_branch
      %67 = sbr.rel (0) target = $region53
    $region52: #{tpu_custom_call.1} parent=1 // pred_region
      _
    $region53: #{tpu_custom_call.1} parent=1 // pred_fallthru
      _
    // Predicated region
    $region54: #{tpu_custom_call.1} parent=1 // pred_check
      _
    $region55: #{tpu_custom_call.1} parent=1 // pred_check_branch
      %69 = sbr.rel (0) target = $region57
    $region56: #{tpu_custom_call.1} parent=1 // pred_region
      _
    $region57: #{tpu_custom_call.1} parent=1 // pred_fallthru
      _
    // Predicated region
    $region58: #{tpu_custom_call.1} parent=1 // pred_check
      _
    $region59: #{tpu_custom_call.1} parent=1 // pred_check_branch
      %71 = sbr.rel (0) target = $region61
    $region60: #{tpu_custom_call.1} parent=1 // pred_region
      %72 = dma.done [#allocation3], 256
    $region61: #{tpu_custom_call.1} parent=1 // pred_fallthru
      _
    // Predicated region
    $region62: #{tpu_custom_call.1} parent=1 // pred_check
      _
    $region63: #{tpu_custom_call.1} parent=1 // pred_check_branch
      %74 = sbr.rel (0) target = $region65
    $region64: #{tpu_custom_call.1} parent=1 // pred_region
      %75 = dma.done [#allocation6], 256
    $region65: #{tpu_custom_call.1} parent=1 // pred_fallthru
      _
    %v76 = vld [vmem:[#allocation2] sm:$0xff]
    %v77 = vld [vmem:[#allocation2 + $0x8] sm:$0xff]
    %v78 = vld [vmem:[#allocation5] sm:$0xff]
    %v79 = vld [vmem:[#allocation5 + $0x8] sm:$0xff]
    %v80 = vld [vmem:[%s2] sm:$0xff]
    %v81 = vld [vmem:[%s2 + $0x8] sm:$0xff]
    %v82 = vld [vmem:[%s2 + $0x10] sm:$0xff]
    %v83 = vld [vmem:[%s2 + $0x18] sm:$0xff]
    %v84 = vld [vmem:[%s3] sm:$0x1]
    %v86 = vlaneseq
    %v87 = vshrl.u32 %v86, 7
    %v88 = vsub.s32 0, %v87
    %v89 = vrot.slane %v84, %v88
    %vm91 = vcmask 261120
    %v93 = vsel %vm91, %v76, 0
    %v96 = vsel %vm91, %v77, 0
    %98 = vmatprep.subr.mxu0 0.0
    %99 = vmatpush1.msra.mxu0 %v80
    %100 = vmatprep.subr.mxu0 0.0
    %101 = vmatpush1.msra.mxu0 %v81
    %102 = vmatprep.subr.mxu0 0.0
    %103 = vmatpush1.msra.mxu0 %v82
    %104 = vmatprep.subr.mxu0 0.0
    %105 = vmatpush1.msra.mxu0 %v83
    %106 = vmatprep.subr.mxu0 0.0
    %107 = vmatpush1.msra.mxu0 0.0
    %108 = vmatprep.subr.mxu0 0.0
    %109 = vmatpush1.msra.mxu0 0.0
    %110 = vmatprep.subr.mxu0 0.0
    %111 = vmatpush1.msra.mxu0 0.0
    %112 = vmatprep.subr.mxu0 0.0
    %113 = vmatpush1.msra.mxu0 0.0
    %114 = vmatprep.subr.mxu0 0.0
    %115 = vmatpush1.msra.mxu0 0.0
    %116 = vmatprep.subr.mxu0 0.0
    %117 = vmatpush1.msra.mxu0 0.0
    %118 = vmatprep.subr.mxu0 0.0
    %119 = vmatpush1.msra.mxu0 0.0
    %120 = vmatprep.subr.mxu0 0.0
    %121 = vmatpush1.msra.mxu0 0.0
    %122 = vmatprep.subr.mxu0 0.0
    %123 = vmatpush1.msra.mxu0 0.0
    %124 = vmatprep.subr.mxu0 0.0
    %125 = vmatpush1.msra.mxu0 0.0
    %126 = vmatprep.subr.mxu0 0.0
    %127 = vmatpush1.msra.mxu0 0.0
    %128 = vmatprep.subr.mxu0 0.0
    %129 = vmatpush1.msra.mxu0 0.0
    %130 = vmatprep.subr.mxu0 0.0
    %131 = vmatpush1.msra.mxu0 0.0
    %132 = vmatprep.subr.mxu0 0.0
    %133 = vmatpush1.msra.mxu0 0.0
    %134 = vmatprep.subr.mxu0 0.0
    %135 = vmatpush1.msra.mxu0 0.0
    %136 = vmatprep.subr.mxu0 0.0
    %137 = vmatpush1.msra.mxu0 0.0
    %138 = vmatprep.subr.mxu0 0.0
    %139 = vmatpush1.msra.mxu0 0.0
    %140 = vmatprep.subr.mxu0 0.0
    %141 = vmatpush1.msra.mxu0 0.0
    %142 = vmatprep.subr.mxu0 0.0
    %143 = vmatpush1.msra.mxu0 0.0
    %144 = vmatprep.subr.mxu0 0.0
    %145 = vmatpush1.msra.mxu0 0.0
    %146 = vmatprep.subr.mxu0 0.0
    %147 = vmatpush1.msra.mxu0 0.0
    %148 = vmatprep.subr.mxu0 0.0
    %149 = vmatpush1.msra.mxu0 0.0
    %150 = vmatprep.subr.mxu0 0.0
    %151 = vmatpush1.msra.mxu0 0.0
    %152 = vmatprep.subr.mxu0 0.0
    %153 = vmatpush1.msra.mxu0 0.0
    %154 = vmatprep.subr.mxu0 0.0
    %155 = vmatpush1.msra.mxu0 0.0
    %156 = vmatprep.subr.mxu0 0.0
    %157 = vmatpush1.msra.mxu0 0.0
    %158 = vmatprep.subr.mxu0 0.0
    %159 = vmatpush1.msra.mxu0 0.0
    %160 = vmatprep.subr.mxu0 0.0
    %161 = vmatpush1.msra.mxu0 0.0
    %162 = vmatprep.mubr.f32.mxu0 0.0
    %163 = vmatmul.mubr.f32.gmra.mrb[0].mxu0 %v93
    %v164 = vpop.f32.mrb[0].mxu0
    %v165 = vadd.f32 %v89, %v164
    %v166 = vpop.f32.mrb[0].mxu0
    %167 = vmatprep.mubr.f32.mxu0 0.0
    %168 = vmatmul.mubr.f32.gmra.mrb[0].mxu0 %v96
    %v169 = vpop.f32.mrb[0].mxu0
    %v170 = vadd.f32 %v89, %v169
    %v171 = vpop.f32.mrb[0].mxu0
    %172 = vdwg.mxu0
    %175 = vrot.lane.b32.xlu0 %v165, 96
    %v176 = vpop.permute.xlu0 %175
    %177 = vrot.lane.b32.xlu0 %v170, 96
    %v178 = vpop.permute.xlu0 %177
    %vm179 = vcmask 64512
    %v180 = vsel %vm179, %v165, 0
    %v182 = vsel %vm179, %v170, 0
    %v184 = vsel %vm179, %v176, 0
    %v186 = vsel %vm179, %v178, 0
    %188 = vmatprep.subr.mxu0 0.0
    %189 = vmatpush1.xpose.msra.mxu0 %v184
    %190 = vmatprep.subr.mxu0 0.0
    %191 = vmatpush1.xpose.msra.mxu0 %v186
    %192 = vmatprep.subr.mxu0 0.0
    %193 = vmatpush1.xpose.msra.mxu0 0.0
    %194 = vmatprep.subr.mxu0 0.0
    %195 = vmatpush1.xpose.msra.mxu0 0.0
    %196 = vmatprep.subr.mxu0 0.0
    %197 = vmatpush1.xpose.msra.mxu0 0.0
    %198 = vmatprep.subr.mxu0 0.0
    %199 = vmatpush1.xpose.msra.mxu0 0.0
    %200 = vmatprep.subr.mxu0 0.0
    %201 = vmatpush1.xpose.msra.mxu0 0.0
    %202 = vmatprep.subr.mxu0 0.0
    %203 = vmatpush1.xpose.msra.mxu0 0.0
    %204 = vmatprep.subr.mxu0 0.0
    %205 = vmatpush1.xpose.msra.mxu0 0.0
    %206 = vmatprep.subr.mxu0 0.0
    %207 = vmatpush1.xpose.msra.mxu0 0.0
    %208 = vmatprep.subr.mxu0 0.0
    %209 = vmatpush1.xpose.msra.mxu0 0.0
    %210 = vmatprep.subr.mxu0 0.0
    %211 = vmatpush1.xpose.msra.mxu0 0.0
    %212 = vmatprep.subr.mxu0 0.0
    %213 = vmatpush1.xpose.msra.mxu0 0.0
    %214 = vmatprep.subr.mxu0 0.0
    %215 = vmatpush1.xpose.msra.mxu0 0.0
    %216 = vmatprep.subr.mxu0 0.0
    %217 = vmatpush1.xpose.msra.mxu0 0.0
    %218 = vmatprep.subr.mxu0 0.0
    %219 = vmatpush1.xpose.msra.mxu0 0.0
    %220 = vmatprep.subr.mxu0 0.0
    %221 = vmatpush1.xpose.msra.mxu0 0.0
    %222 = vmatprep.subr.mxu0 0.0
    %223 = vmatpush1.xpose.msra.mxu0 0.0
    %224 = vmatprep.subr.mxu0 0.0
    %225 = vmatpush1.xpose.msra.mxu0 0.0
    %226 = vmatprep.subr.mxu0 0.0
    %227 = vmatpush1.xpose.msra.mxu0 0.0
    %228 = vmatprep.subr.mxu0 0.0
    %229 = vmatpush1.xpose.msra.mxu0 0.0
    %230 = vmatprep.subr.mxu0 0.0
    %231 = vmatpush1.xpose.msra.mxu0 0.0
    %232 = vmatprep.subr.mxu0 0.0
    %233 = vmatpush1.xpose.msra.mxu0 0.0
    %234 = vmatprep.subr.mxu0 0.0
    %235 = vmatpush1.xpose.msra.mxu0 0.0
    %236 = vmatprep.subr.mxu0 0.0
    %237 = vmatpush1.xpose.msra.mxu0 0.0
    %238 = vmatprep.subr.mxu0 0.0
    %239 = vmatpush1.xpose.msra.mxu0 0.0
    %240 = vmatprep.subr.mxu0 0.0
    %241 = vmatpush1.xpose.msra.mxu0 0.0
    %242 = vmatprep.subr.mxu0 0.0
    %243 = vmatpush1.xpose.msra.mxu0 0.0
    %244 = vmatprep.subr.mxu0 0.0
    %245 = vmatpush1.xpose.msra.mxu0 0.0
    %246 = vmatprep.subr.mxu0 0.0
    %247 = vmatpush1.xpose.msra.mxu0 0.0
    %248 = vmatprep.subr.mxu0 0.0
    %249 = vmatpush1.xpose.msra.mxu0 0.0
    %250 = vmatprep.subr.mxu0 0.0
    %251 = vmatpush1.xpose.msra.mxu0 0.0
    %252 = vmatprep.mubr.f32.mxu0 0.0
    %253 = vmatmul.mubr.f32.gmra.mrb[0].mxu0 %v180
    %v254 = vpop.f32.mrb[0].mxu0
    %v255 = vadd.f32 %v78, %v254
    %v256 = vpop.f32.mrb[0].mxu0
    %257 = vmatprep.mubr.f32.mxu0 0.0
    %258 = vmatmul.mubr.f32.gmra.mrb[0].mxu0 %v182
    %v259 = vpop.f32.mrb[0].mxu0
    %v260 = vadd.f32 %v79, %v259
    %v261 = vpop.f32.mrb[0].mxu0
    %262 = vdwg.mxu0
    %vm263 = vcmask 130048
    %v264 = vsel %vm263, %v255, -inf
    %265 = vmax.xlane.f32.xlu0 %v264
    %v266 = vpop.xlane.xlu0 %265
    %v267 = vsel %vm263, %v260, -inf
    %268 = vmax.xlane.f32.xlu0 %v267
    %v269 = vpop.xlane.xlu0 %268
    %v270 = vsub.f32 %v255, %v266
    %v271 = vsub.f32 %v260, %v269
    %v272 = vmul.f32 %v270, 1.442695
    %v273 = vpow.pop %v272
    %v274 = vmul.f32 %v271, 1.442695
    %v275 = vpow.pop %v274
    %v276 = vsel %vm263, %v273, 0.0
    %277 = vadd.xlane.f32.xlu0 %v276
    %v278 = vpop.xlane.xlu0 %277
    %v279 = vsel %vm263, %v275, 0.0
    %280 = vadd.xlane.f32.xlu0 %v279
    %v281 = vpop.xlane.xlu0 %280
    %v282 = vrcp.pop %v278
    %v283 = vrcp.pop %v281
    %v284 = vmul.f32 %v273, %v282
    %v285 = vmul.f32 %v275, %v283
    %286 = vrot.lane.b32.xlu0 %v165, 64
    %v287 = vpop.permute.xlu0 %286
    %288 = vrot.lane.b32.xlu0 %v170, 64
    %v289 = vpop.permute.xlu0 %288
    %v293 = vsel %vm263, %v284, 0
    %v296 = vsel %vm263, %v285, 0
    %298 = vmatprep.subr.mxu0 0.0
    %299 = vmatpush1.msra.mxu0 %v287
    %300 = vmatprep.subr.mxu0 0.0
    %301 = vmatpush1.msra.mxu0 %v289
    %302 = vmatprep.subr.mxu0 0.0
    %303 = vmatpush1.msra.mxu0 0.0
    %304 = vmatprep.subr.mxu0 0.0
    %305 = vmatpush1.msra.mxu0 0.0
    %306 = vmatprep.subr.mxu0 0.0
    %307 = vmatpush1.msra.mxu0 0.0
    %308 = vmatprep.subr.mxu0 0.0
    %309 = vmatpush1.msra.mxu0 0.0
    %310 = vmatprep.subr.mxu0 0.0
    %311 = vmatpush1.msra.mxu0 0.0
    %312 = vmatprep.subr.mxu0 0.0
    %313 = vmatpush1.msra.mxu0 0.0
    %314 = vmatprep.subr.mxu0 0.0
    %315 = vmatpush1.msra.mxu0 0.0
    %316 = vmatprep.subr.mxu0 0.0
    %317 = vmatpush1.msra.mxu0 0.0
    %318 = vmatprep.subr.mxu0 0.0
    %319 = vmatpush1.msra.mxu0 0.0
    %320 = vmatprep.subr.mxu0 0.0
    %321 = vmatpush1.msra.mxu0 0.0
    %322 = vmatprep.subr.mxu0 0.0
    %323 = vmatpush1.msra.mxu0 0.0
    %324 = vmatprep.subr.mxu0 0.0
    %325 = vmatpush1.msra.mxu0 0.0
    %326 = vmatprep.subr.mxu0 0.0
    %327 = vmatpush1.msra.mxu0 0.0
    %328 = vmatprep.subr.mxu0 0.0
    %329 = vmatpush1.msra.mxu0 0.0
    %330 = vmatprep.subr.mxu0 0.0
    %331 = vmatpush1.msra.mxu0 0.0
    %332 = vmatprep.subr.mxu0 0.0
    %333 = vmatpush1.msra.mxu0 0.0
    %334 = vmatprep.subr.mxu0 0.0
    %335 = vmatpush1.msra.mxu0 0.0
    %336 = vmatprep.subr.mxu0 0.0
    %337 = vmatpush1.msra.mxu0 0.0
    %338 = vmatprep.subr.mxu0 0.0
    %339 = vmatpush1.msra.mxu0 0.0
    %340 = vmatprep.subr.mxu0 0.0
    %341 = vmatpush1.msra.mxu0 0.0
    %342 = vmatprep.subr.mxu0 0.0
    %343 = vmatpush1.msra.mxu0 0.0
    %344 = vmatprep.subr.mxu0 0.0
    %345 = vmatpush1.msra.mxu0 0.0
    %346 = vmatprep.subr.mxu0 0.0
    %347 = vmatpush1.msra.mxu0 0.0
    %348 = vmatprep.subr.mxu0 0.0
    %349 = vmatpush1.msra.mxu0 0.0
    %350 = vmatprep.subr.mxu0 0.0
    %351 = vmatpush1.msra.mxu0 0.0
    %352 = vmatprep.subr.mxu0 0.0
    %353 = vmatpush1.msra.mxu0 0.0
    %354 = vmatprep.subr.mxu0 0.0
    %355 = vmatpush1.msra.mxu0 0.0
    %356 = vmatprep.subr.mxu0 0.0
    %357 = vmatpush1.msra.mxu0 0.0
    %358 = vmatprep.subr.mxu0 0.0
    %359 = vmatpush1.msra.mxu0 0.0
    %360 = vmatprep.subr.mxu0 0.0
    %361 = vmatpush1.msra.mxu0 0.0
    %362 = vmatprep.mubr.f32.mxu0 0.0
    %363 = vmatmul.mubr.f32.gmra.mrb[0].mxu0 %v293
    %v364 = vpop.f32.mrb[0].mxu0
    %v365 = vadd.f32 0.0, %v364
    %v366 = vpop.f32.mrb[0].mxu0
    %367 = vmatprep.mubr.f32.mxu0 0.0
    %368 = vmatmul.mubr.f32.gmra.mrb[0].mxu0 %v296
    %v369 = vpop.f32.mrb[0].mxu0
    %v370 = vadd.f32 0.0, %v369
    %v371 = vpop.f32.mrb[0].mxu0
    %372 = vdwg.mxu0
    %373 = vrot.lane.b32.xlu0 %v165, 120
    %v374 = vpop.permute.xlu0 %373
    %375 = vrot.lane.b32.xlu0 %v170, 120
    %v376 = vpop.permute.xlu0 %375
    %377 = vrot.lane.b32.xlu0 %v165, 88
    %v378 = vpop.permute.xlu0 %377
    %379 = vrot.lane.b32.xlu0 %v170, 88
    %v380 = vpop.permute.xlu0 %379
    %v381 = vsel %vm179, %v374, 0
    %v383 = vsel %vm179, %v376, 0
    %v385 = vsel %vm179, %v378, 0
    %v387 = vsel %vm179, %v380, 0
    %389 = vmatprep.subr.mxu0 0.0
    %390 = vmatpush1.xpose.msra.mxu0 %v385
    %391 = vmatprep.subr.mxu0 0.0
    %392 = vmatpush1.xpose.msra.mxu0 %v387
    %393 = vmatprep.subr.mxu0 0.0
    %394 = vmatpush1.xpose.msra.mxu0 0.0
    %395 = vmatprep.subr.mxu0 0.0
    %396 = vmatpush1.xpose.msra.mxu0 0.0
    %397 = vmatprep.subr.mxu0 0.0
    %398 = vmatpush1.xpose.msra.mxu0 0.0
    %399 = vmatprep.subr.mxu0 0.0
    %400 = vmatpush1.xpose.msra.mxu0 0.0
    %401 = vmatprep.subr.mxu0 0.0
    %402 = vmatpush1.xpose.msra.mxu0 0.0
    %403 = vmatprep.subr.mxu0 0.0
    %404 = vmatpush1.xpose.msra.mxu0 0.0
    %405 = vmatprep.subr.mxu0 0.0
    %406 = vmatpush1.xpose.msra.mxu0 0.0
    %407 = vmatprep.subr.mxu0 0.0
    %408 = vmatpush1.xpose.msra.mxu0 0.0
    %409 = vmatprep.subr.mxu0 0.0
    %410 = vmatpush1.xpose.msra.mxu0 0.0
    %411 = vmatprep.subr.mxu0 0.0
    %412 = vmatpush1.xpose.msra.mxu0 0.0
    %413 = vmatprep.subr.mxu0 0.0
    %414 = vmatpush1.xpose.msra.mxu0 0.0
    %415 = vmatprep.subr.mxu0 0.0
    %416 = vmatpush1.xpose.msra.mxu0 0.0
    %417 = vmatprep.subr.mxu0 0.0
    %418 = vmatpush1.xpose.msra.mxu0 0.0
    %419 = vmatprep.subr.mxu0 0.0
    %420 = vmatpush1.xpose.msra.mxu0 0.0
    %421 = vmatprep.subr.mxu0 0.0
    %422 = vmatpush1.xpose.msra.mxu0 0.0
    %423 = vmatprep.subr.mxu0 0.0
    %424 = vmatpush1.xpose.msra.mxu0 0.0
    %425 = vmatprep.subr.mxu0 0.0
    %426 = vmatpush1.xpose.msra.mxu0 0.0
    %427 = vmatprep.subr.mxu0 0.0
    %428 = vmatpush1.xpose.msra.mxu0 0.0
    %429 = vmatprep.subr.mxu0 0.0
    %430 = vmatpush1.xpose.msra.mxu0 0.0
    %431 = vmatprep.subr.mxu0 0.0
    %432 = vmatpush1.xpose.msra.mxu0 0.0
    %433 = vmatprep.subr.mxu0 0.0
    %434 = vmatpush1.xpose.msra.mxu0 0.0
    %435 = vmatprep.subr.mxu0 0.0
    %436 = vmatpush1.xpose.msra.mxu0 0.0
    %437 = vmatprep.subr.mxu0 0.0
    %438 = vmatpush1.xpose.msra.mxu0 0.0
    %439 = vmatprep.subr.mxu0 0.0
    %440 = vmatpush1.xpose.msra.mxu0 0.0
    %441 = vmatprep.subr.mxu0 0.0
    %442 = vmatpush1.xpose.msra.mxu0 0.0
    %443 = vmatprep.subr.mxu0 0.0
    %444 = vmatpush1.xpose.msra.mxu0 0.0
    %445 = vmatprep.subr.mxu0 0.0
    %446 = vmatpush1.xpose.msra.mxu0 0.0
    %447 = vmatprep.subr.mxu0 0.0
    %448 = vmatpush1.xpose.msra.mxu0 0.0
    %449 = vmatprep.subr.mxu0 0.0
    %450 = vmatpush1.xpose.msra.mxu0 0.0
    %451 = vmatprep.subr.mxu0 0.0
    %452 = vmatpush1.xpose.msra.mxu0 0.0
    %453 = vmatprep.mubr.f32.mxu0 0.0
    %454 = vmatmul.mubr.f32.gmra.mrb[0].mxu0 %v381
    %v455 = vpop.f32.mrb[0].mxu0
    %v456 = vadd.f32 %v78, %v455
    %v457 = vpop.f32.mrb[0].mxu0
    %458 = vmatprep.mubr.f32.mxu0 0.0
    %459 = vmatmul.mubr.f32.gmra.mrb[0].mxu0 %v383
    %v460 = vpop.f32.mrb[0].mxu0
    %v461 = vadd.f32 %v79, %v460
    %v462 = vpop.f32.mrb[0].mxu0
    %463 = vdwg.mxu0
    %v464 = vsel %vm263, %v456, -inf
    %465 = vmax.xlane.f32.xlu0 %v464
    %v466 = vpop.xlane.xlu0 %465
    %v467 = vsel %vm263, %v461, -inf
    %468 = vmax.xlane.f32.xlu0 %v467
    %v469 = vpop.xlane.xlu0 %468
    %v470 = vsub.f32 %v456, %v466
    %v471 = vsub.f32 %v461, %v469
    %v472 = vmul.f32 %v470, 1.442695
    %v473 = vpow.pop %v472
    %v474 = vmul.f32 %v471, 1.442695
    %v475 = vpow.pop %v474
    %v476 = vsel %vm263, %v473, 0.0
    %477 = vadd.xlane.f32.xlu0 %v476
    %v478 = vpop.xlane.xlu0 %477
    %v479 = vsel %vm263, %v475, 0.0
    %480 = vadd.xlane.f32.xlu0 %v479
    %v481 = vpop.xlane.xlu0 %480
    %v482 = vrcp.pop %v478
    %v483 = vrcp.pop %v481
    %v484 = vmul.f32 %v473, %v482
    %v485 = vmul.f32 %v475, %v483
    %486 = vrot.lane.b32.xlu0 %v165, 56
    %v487 = vpop.permute.xlu0 %486
    %488 = vrot.lane.b32.xlu0 %v170, 56
    %v489 = vpop.permute.xlu0 %488
    %v493 = vsel %vm263, %v484, 0
    %v496 = vsel %vm263, %v485, 0
    %498 = vmatprep.subr.mxu0 0.0
    %499 = vmatpush1.msra.mxu0 %v487
    %500 = vmatprep.subr.mxu0 0.0
    %501 = vmatpush1.msra.mxu0 %v489
    %502 = vmatprep.subr.mxu0 0.0
    %503 = vmatpush1.msra.mxu0 0.0
    %504 = vmatprep.subr.mxu0 0.0
    %505 = vmatpush1.msra.mxu0 0.0
    %506 = vmatprep.subr.mxu0 0.0
    %507 = vmatpush1.msra.mxu0 0.0
    %508 = vmatprep.subr.mxu0 0.0
    %509 = vmatpush1.msra.mxu0 0.0
    %510 = vmatprep.subr.mxu0 0.0
    %511 = vmatpush1.msra.mxu0 0.0
    %512 = vmatprep.subr.mxu0 0.0
    %513 = vmatpush1.msra.mxu0 0.0
    %514 = vmatprep.subr.mxu0 0.0
    %515 = vmatpush1.msra.mxu0 0.0
    %516 = vmatprep.subr.mxu0 0.0
    %517 = vmatpush1.msra.mxu0 0.0
    %518 = vmatprep.subr.mxu0 0.0
    %519 = vmatpush1.msra.mxu0 0.0
    %520 = vmatprep.subr.mxu0 0.0
    %521 = vmatpush1.msra.mxu0 0.0
    %522 = vmatprep.subr.mxu0 0.0
    %523 = vmatpush1.msra.mxu0 0.0
    %524 = vmatprep.subr.mxu0 0.0
    %525 = vmatpush1.msra.mxu0 0.0
    %526 = vmatprep.subr.mxu0 0.0
    %527 = vmatpush1.msra.mxu0 0.0
    %528 = vmatprep.subr.mxu0 0.0
    %529 = vmatpush1.msra.mxu0 0.0
    %530 = vmatprep.subr.mxu0 0.0
    %531 = vmatpush1.msra.mxu0 0.0
    %532 = vmatprep.subr.mxu0 0.0
    %533 = vmatpush1.msra.mxu0 0.0
    %534 = vmatprep.subr.mxu0 0.0
    %535 = vmatpush1.msra.mxu0 0.0
    %536 = vmatprep.subr.mxu0 0.0
    %537 = vmatpush1.msra.mxu0 0.0
    %538 = vmatprep.subr.mxu0 0.0
    %539 = vmatpush1.msra.mxu0 0.0
    %540 = vmatprep.subr.mxu0 0.0
    %541 = vmatpush1.msra.mxu0 0.0
    %542 = vmatprep.subr.mxu0 0.0
    %543 = vmatpush1.msra.mxu0 0.0
    %544 = vmatprep.subr.mxu0 0.0
    %545 = vmatpush1.msra.mxu0 0.0
    %546 = vmatprep.subr.mxu0 0.0
    %547 = vmatpush1.msra.mxu0 0.0
    %548 = vmatprep.subr.mxu0 0.0
    %549 = vmatpush1.msra.mxu0 0.0
    %550 = vmatprep.subr.mxu0 0.0
    %551 = vmatpush1.msra.mxu0 0.0
    %552 = vmatprep.subr.mxu0 0.0
    %553 = vmatpush1.msra.mxu0 0.0
    %554 = vmatprep.subr.mxu0 0.0
    %555 = vmatpush1.msra.mxu0 0.0
    %556 = vmatprep.subr.mxu0 0.0
    %557 = vmatpush1.msra.mxu0 0.0
    %558 = vmatprep.subr.mxu0 0.0
    %559 = vmatpush1.msra.mxu0 0.0
    %560 = vmatprep.subr.mxu0 0.0
    %561 = vmatpush1.msra.mxu0 0.0
    %562 = vmatprep.mubr.f32.mxu0 0.0
    %563 = vmatmul.mubr.f32.gmra.mrb[0].mxu0 %v493
    %v564 = vpop.f32.mrb[0].mxu0
    %v565 = vadd.f32 0.0, %v564
    %v566 = vpop.f32.mrb[0].mxu0
    %567 = vmatprep.mubr.f32.mxu0 0.0
    %568 = vmatmul.mubr.f32.gmra.mrb[0].mxu0 %v496
    %v569 = vpop.f32.mrb[0].mxu0
    %v570 = vadd.f32 0.0, %v569
    %v571 = vpop.f32.mrb[0].mxu0
    %572 = vdwg.mxu0
    %573 = vrot.lane.b32.xlu0 %v165, 112
    %v574 = vpop.permute.xlu0 %573
    %575 = vrot.lane.b32.xlu0 %v170, 112
    %v576 = vpop.permute.xlu0 %575
    %577 = vrot.lane.b32.xlu0 %v165, 80
    %v578 = vpop.permute.xlu0 %577
    %579 = vrot.lane.b32.xlu0 %v170, 80
    %v580 = vpop.permute.xlu0 %579
    %v581 = vsel %vm179, %v574, 0
    %v583 = vsel %vm179, %v576, 0
    %v585 = vsel %vm179, %v578, 0
    %v587 = vsel %vm179, %v580, 0
    %589 = vmatprep.subr.mxu0 0.0
    %590 = vmatpush1.xpose.msra.mxu0 %v585
    %591 = vmatprep.subr.mxu0 0.0
    %592 = vmatpush1.xpose.msra.mxu0 %v587
    %593 = vmatprep.subr.mxu0 0.0
    %594 = vmatpush1.xpose.msra.mxu0 0.0
    %595 = vmatprep.subr.mxu0 0.0
    %596 = vmatpush1.xpose.msra.mxu0 0.0
    %597 = vmatprep.subr.mxu0 0.0
    %598 = vmatpush1.xpose.msra.mxu0 0.0
    %599 = vmatprep.subr.mxu0 0.0
    %600 = vmatpush1.xpose.msra.mxu0 0.0
    %601 = vmatprep.subr.mxu0 0.0
    %602 = vmatpush1.xpose.msra.mxu0 0.0
    %603 = vmatprep.subr.mxu0 0.0
    %604 = vmatpush1.xpose.msra.mxu0 0.0
    %605 = vmatprep.subr.mxu0 0.0
    %606 = vmatpush1.xpose.msra.mxu0 0.0
    %607 = vmatprep.subr.mxu0 0.0
    %608 = vmatpush1.xpose.msra.mxu0 0.0
    %609 = vmatprep.subr.mxu0 0.0
    %610 = vmatpush1.xpose.msra.mxu0 0.0
    %611 = vmatprep.subr.mxu0 0.0
    %612 = vmatpush1.xpose.msra.mxu0 0.0
    %613 = vmatprep.subr.mxu0 0.0
    %614 = vmatpush1.xpose.msra.mxu0 0.0
    %615 = vmatprep.subr.mxu0 0.0
    %616 = vmatpush1.xpose.msra.mxu0 0.0
    %617 = vmatprep.subr.mxu0 0.0
    %618 = vmatpush1.xpose.msra.mxu0 0.0
    %619 = vmatprep.subr.mxu0 0.0
    %620 = vmatpush1.xpose.msra.mxu0 0.0
    %621 = vmatprep.subr.mxu0 0.0
    %622 = vmatpush1.xpose.msra.mxu0 0.0
    %623 = vmatprep.subr.mxu0 0.0
    %624 = vmatpush1.xpose.msra.mxu0 0.0
    %625 = vmatprep.subr.mxu0 0.0
    %626 = vmatpush1.xpose.msra.mxu0 0.0
    %627 = vmatprep.subr.mxu0 0.0
    %628 = vmatpush1.xpose.msra.mxu0 0.0
    %629 = vmatprep.subr.mxu0 0.0
    %630 = vmatpush1.xpose.msra.mxu0 0.0
    %631 = vmatprep.subr.mxu0 0.0
    %632 = vmatpush1.xpose.msra.mxu0 0.0
    %633 = vmatprep.subr.mxu0 0.0
    %634 = vmatpush1.xpose.msra.mxu0 0.0
    %635 = vmatprep.subr.mxu0 0.0
    %636 = vmatpush1.xpose.msra.mxu0 0.0
    %637 = vmatprep.subr.mxu0 0.0
    %638 = vmatpush1.xpose.msra.mxu0 0.0
    %639 = vmatprep.subr.mxu0 0.0
    %640 = vmatpush1.xpose.msra.mxu0 0.0
    %641 = vmatprep.subr.mxu0 0.0
    %642 = vmatpush1.xpose.msra.mxu0 0.0
    %643 = vmatprep.subr.mxu0 0.0
    %644 = vmatpush1.xpose.msra.mxu0 0.0
    %645 = vmatprep.subr.mxu0 0.0
    %646 = vmatpush1.xpose.msra.mxu0 0.0
    %647 = vmatprep.subr.mxu0 0.0
    %648 = vmatpush1.xpose.msra.mxu0 0.0
    %649 = vmatprep.subr.mxu0 0.0
    %650 = vmatpush1.xpose.msra.mxu0 0.0
    %651 = vmatprep.subr.mxu0 0.0
    %652 = vmatpush1.xpose.msra.mxu0 0.0
    %653 = vmatprep.mubr.f32.mxu0 0.0
    %654 = vmatmul.mubr.f32.gmra.mrb[0].mxu0 %v581
    %v655 = vpop.f32.mrb[0].mxu0
    %v656 = vadd.f32 %v78, %v655
    %v657 = vpop.f32.mrb[0].mxu0
    %658 = vmatprep.mubr.f32.mxu0 0.0
    %659 = vmatmul.mubr.f32.gmra.mrb[0].mxu0 %v583
    %v660 = vpop.f32.mrb[0].mxu0
    %v661 = vadd.f32 %v79, %v660
    %v662 = vpop.f32.mrb[0].mxu0
    %663 = vdwg.mxu0
    %v664 = vsel %vm263, %v656, -inf
    %665 = vmax.xlane.f32.xlu0 %v664
    %v666 = vpop.xlane.xlu0 %665
    %v667 = vsel %vm263, %v661, -inf
    %668 = vmax.xlane.f32.xlu0 %v667
    %v669 = vpop.xlane.xlu0 %668
    %v670 = vsub.f32 %v656, %v666
    %v671 = vsub.f32 %v661, %v669
    %v672 = vmul.f32 %v670, 1.442695
    %v673 = vpow.pop %v672
    %v674 = vmul.f32 %v671, 1.442695
    %v675 = vpow.pop %v674
    %v676 = vsel %vm263, %v673, 0.0
    %677 = vadd.xlane.f32.xlu0 %v676
    %v678 = vpop.xlane.xlu0 %677
    %v679 = vsel %vm263, %v675, 0.0
    %680 = vadd.xlane.f32.xlu0 %v679
    %v681 = vpop.xlane.xlu0 %680
    %v682 = vrcp.pop %v678
    %v683 = vrcp.pop %v681
    %v684 = vmul.f32 %v673, %v682
    %v685 = vmul.f32 %v675, %v683
    %686 = vrot.lane.b32.xlu0 %v165, 48
    %v687 = vpop.permute.xlu0 %686
    %688 = vrot.lane.b32.xlu0 %v170, 48
    %v689 = vpop.permute.xlu0 %688
    %v693 = vsel %vm263, %v684, 0
    %v696 = vsel %vm263, %v685, 0
    %698 = vmatprep.subr.mxu0 0.0
    %699 = vmatpush1.msra.mxu0 %v687
    %700 = vmatprep.subr.mxu0 0.0
    %701 = vmatpush1.msra.mxu0 %v689
    %702 = vmatprep.subr.mxu0 0.0
    %703 = vmatpush1.msra.mxu0 0.0
    %704 = vmatprep.subr.mxu0 0.0
    %705 = vmatpush1.msra.mxu0 0.0
    %706 = vmatprep.subr.mxu0 0.0
    %707 = vmatpush1.msra.mxu0 0.0
    %708 = vmatprep.subr.mxu0 0.0
    %709 = vmatpush1.msra.mxu0 0.0
    %710 = vmatprep.subr.mxu0 0.0
    %711 = vmatpush1.msra.mxu0 0.0
    %712 = vmatprep.subr.mxu0 0.0
    %713 = vmatpush1.msra.mxu0 0.0
    %714 = vmatprep.subr.mxu0 0.0
    %715 = vmatpush1.msra.mxu0 0.0
    %716 = vmatprep.subr.mxu0 0.0
    %717 = vmatpush1.msra.mxu0 0.0
    %718 = vmatprep.subr.mxu0 0.0
    %719 = vmatpush1.msra.mxu0 0.0
    %720 = vmatprep.subr.mxu0 0.0
    %721 = vmatpush1.msra.mxu0 0.0
    %722 = vmatprep.subr.mxu0 0.0
    %723 = vmatpush1.msra.mxu0 0.0
    %724 = vmatprep.subr.mxu0 0.0
    %725 = vmatpush1.msra.mxu0 0.0
    %726 = vmatprep.subr.mxu0 0.0
    %727 = vmatpush1.msra.mxu0 0.0
    %728 = vmatprep.subr.mxu0 0.0
    %729 = vmatpush1.msra.mxu0 0.0
    %730 = vmatprep.subr.mxu0 0.0
    %731 = vmatpush1.msra.mxu0 0.0
    %732 = vmatprep.subr.mxu0 0.0
    %733 = vmatpush1.msra.mxu0 0.0
    %734 = vmatprep.subr.mxu0 0.0
    %735 = vmatpush1.msra.mxu0 0.0
    %736 = vmatprep.subr.mxu0 0.0
    %737 = vmatpush1.msra.mxu0 0.0
    %738 = vmatprep.subr.mxu0 0.0
    %739 = vmatpush1.msra.mxu0 0.0
    %740 = vmatprep.subr.mxu0 0.0
    %741 = vmatpush1.msra.mxu0 0.0
    %742 = vmatprep.subr.mxu0 0.0
    %743 = vmatpush1.msra.mxu0 0.0
    %744 = vmatprep.subr.mxu0 0.0
    %745 = vmatpush1.msra.mxu0 0.0
    %746 = vmatprep.subr.mxu0 0.0
    %747 = vmatpush1.msra.mxu0 0.0
    %748 = vmatprep.subr.mxu0 0.0
    %749 = vmatpush1.msra.mxu0 0.0
    %750 = vmatprep.subr.mxu0 0.0
    %751 = vmatpush1.msra.mxu0 0.0
    %752 = vmatprep.subr.mxu0 0.0
    %753 = vmatpush1.msra.mxu0 0.0
    %754 = vmatprep.subr.mxu0 0.0
    %755 = vmatpush1.msra.mxu0 0.0
    %756 = vmatprep.subr.mxu0 0.0
    %757 = vmatpush1.msra.mxu0 0.0
    %758 = vmatprep.subr.mxu0 0.0
    %759 = vmatpush1.msra.mxu0 0.0
    %760 = vmatprep.subr.mxu0 0.0
    %761 = vmatpush1.msra.mxu0 0.0
    %762 = vmatprep.mubr.f32.mxu0 0.0
    %763 = vmatmul.mubr.f32.gmra.mrb[0].mxu0 %v693
    %v764 = vpop.f32.mrb[0].mxu0
    %v765 = vadd.f32 0.0, %v764
    %v766 = vpop.f32.mrb[0].mxu0
    %767 = vmatprep.mubr.f32.mxu0 0.0
    %768 = vmatmul.mubr.f32.gmra.mrb[0].mxu0 %v696
    %v769 = vpop.f32.mrb[0].mxu0
    %v770 = vadd.f32 0.0, %v769
    %v771 = vpop.f32.mrb[0].mxu0
    %772 = vdwg.mxu0
    %773 = vrot.lane.b32.xlu0 %v165, 104
    %v774 = vpop.permute.xlu0 %773
    %775 = vrot.lane.b32.xlu0 %v170, 104
    %v776 = vpop.permute.xlu0 %775
    %777 = vrot.lane.b32.xlu0 %v165, 72
    %v778 = vpop.permute.xlu0 %777
    %779 = vrot.lane.b32.xlu0 %v170, 72
    %v780 = vpop.permute.xlu0 %779
    %v781 = vsel %vm179, %v774, 0
    %v783 = vsel %vm179, %v776, 0
    %v785 = vsel %vm179, %v778, 0
    %v787 = vsel %vm179, %v780, 0
    %789 = vmatprep.subr.mxu0 0.0
    %790 = vmatpush1.xpose.msra.mxu0 %v785
    %791 = vmatprep.subr.mxu0 0.0
    %792 = vmatpush1.xpose.msra.mxu0 %v787
    %793 = vmatprep.subr.mxu0 0.0
    %794 = vmatpush1.xpose.msra.mxu0 0.0
    %795 = vmatprep.subr.mxu0 0.0
    %796 = vmatpush1.xpose.msra.mxu0 0.0
    %797 = vmatprep.subr.mxu0 0.0
    %798 = vmatpush1.xpose.msra.mxu0 0.0
    %799 = vmatprep.subr.mxu0 0.0
    %800 = vmatpush1.xpose.msra.mxu0 0.0
    %801 = vmatprep.subr.mxu0 0.0
    %802 = vmatpush1.xpose.msra.mxu0 0.0
    %803 = vmatprep.subr.mxu0 0.0
    %804 = vmatpush1.xpose.msra.mxu0 0.0
    %805 = vmatprep.subr.mxu0 0.0
    %806 = vmatpush1.xpose.msra.mxu0 0.0
    %807 = vmatprep.subr.mxu0 0.0
    %808 = vmatpush1.xpose.msra.mxu0 0.0
    %809 = vmatprep.subr.mxu0 0.0
    %810 = vmatpush1.xpose.msra.mxu0 0.0
    %811 = vmatprep.subr.mxu0 0.0
    %812 = vmatpush1.xpose.msra.mxu0 0.0
    %813 = vmatprep.subr.mxu0 0.0
    %814 = vmatpush1.xpose.msra.mxu0 0.0
    %815 = vmatprep.subr.mxu0 0.0
    %816 = vmatpush1.xpose.msra.mxu0 0.0
    %817 = vmatprep.subr.mxu0 0.0
    %818 = vmatpush1.xpose.msra.mxu0 0.0
    %819 = vmatprep.subr.mxu0 0.0
    %820 = vmatpush1.xpose.msra.mxu0 0.0
    %821 = vmatprep.subr.mxu0 0.0
    %822 = vmatpush1.xpose.msra.mxu0 0.0
    %823 = vmatprep.subr.mxu0 0.0
    %824 = vmatpush1.xpose.msra.mxu0 0.0
    %825 = vmatprep.subr.mxu0 0.0
    %826 = vmatpush1.xpose.msra.mxu0 0.0
    %827 = vmatprep.subr.mxu0 0.0
    %828 = vmatpush1.xpose.msra.mxu0 0.0
    %829 = vmatprep.subr.mxu0 0.0
    %830 = vmatpush1.xpose.msra.mxu0 0.0
    %831 = vmatprep.subr.mxu0 0.0
    %832 = vmatpush1.xpose.msra.mxu0 0.0
    %833 = vmatprep.subr.mxu0 0.0
    %834 = vmatpush1.xpose.msra.mxu0 0.0
    %835 = vmatprep.subr.mxu0 0.0
    %836 = vmatpush1.xpose.msra.mxu0 0.0
    %837 = vmatprep.subr.mxu0 0.0
    %838 = vmatpush1.xpose.msra.mxu0 0.0
    %839 = vmatprep.subr.mxu0 0.0
    %840 = vmatpush1.xpose.msra.mxu0 0.0
    %841 = vmatprep.subr.mxu0 0.0
    %842 = vmatpush1.xpose.msra.mxu0 0.0
    %843 = vmatprep.subr.mxu0 0.0
    %844 = vmatpush1.xpose.msra.mxu0 0.0
    %845 = vmatprep.subr.mxu0 0.0
    %846 = vmatpush1.xpose.msra.mxu0 0.0
    %847 = vmatprep.subr.mxu0 0.0
    %848 = vmatpush1.xpose.msra.mxu0 0.0
    %849 = vmatprep.subr.mxu0 0.0
    %850 = vmatpush1.xpose.msra.mxu0 0.0
    %851 = vmatprep.subr.mxu0 0.0
    %852 = vmatpush1.xpose.msra.mxu0 0.0
    %853 = vmatprep.mubr.f32.mxu0 0.0
    %854 = vmatmul.mubr.f32.gmra.mrb[0].mxu0 %v781
    %v855 = vpop.f32.mrb[0].mxu0
    %v856 = vadd.f32 %v78, %v855
    %v857 = vpop.f32.mrb[0].mxu0
    %858 = vmatprep.mubr.f32.mxu0 0.0
    %859 = vmatmul.mubr.f32.gmra.mrb[0].mxu0 %v783
    %v860 = vpop.f32.mrb[0].mxu0
    %v861 = vadd.f32 %v79, %v860
    %v862 = vpop.f32.mrb[0].mxu0
    %863 = vdwg.mxu0
    %v864 = vsel %vm263, %v856, -inf
    %865 = vmax.xlane.f32.xlu0 %v864
    %v866 = vpop.xlane.xlu0 %865
    %v867 = vsel %vm263, %v861, -inf
    %868 = vmax.xlane.f32.xlu0 %v867
    %v869 = vpop.xlane.xlu0 %868
    %v870 = vsub.f32 %v856, %v866
    %v871 = vsub.f32 %v861, %v869
    %v872 = vmul.f32 %v870, 1.442695
    %v873 = vpow.pop %v872
    %v874 = vmul.f32 %v871, 1.442695
    %v875 = vpow.pop %v874
    %v876 = vsel %vm263, %v873, 0.0
    %877 = vadd.xlane.f32.xlu0 %v876
    %v878 = vpop.xlane.xlu0 %877
    %v879 = vsel %vm263, %v875, 0.0
    %880 = vadd.xlane.f32.xlu0 %v879
    %v881 = vpop.xlane.xlu0 %880
    %v882 = vrcp.pop %v878
    %v883 = vrcp.pop %v881
    %v884 = vmul.f32 %v873, %v882
    %v885 = vmul.f32 %v875, %v883
    %886 = vrot.lane.b32.xlu0 %v165, 40
    %v887 = vpop.permute.xlu0 %886
    %888 = vrot.lane.b32.xlu0 %v170, 40
    %v889 = vpop.permute.xlu0 %888
    %v893 = vsel %vm263, %v884, 0
    %v896 = vsel %vm263, %v885, 0
    %898 = vmatprep.subr.mxu0 0.0
    %899 = vmatpush1.msra.mxu0 %v887
    %900 = vmatprep.subr.mxu0 0.0
    %901 = vmatpush1.msra.mxu0 %v889
    %902 = vmatprep.subr.mxu0 0.0
    %903 = vmatpush1.msra.mxu0 0.0
    %904 = vmatprep.subr.mxu0 0.0
    %905 = vmatpush1.msra.mxu0 0.0
    %906 = vmatprep.subr.mxu0 0.0
    %907 = vmatpush1.msra.mxu0 0.0
    %908 = vmatprep.subr.mxu0 0.0
    %909 = vmatpush1.msra.mxu0 0.0
    %910 = vmatprep.subr.mxu0 0.0
    %911 = vmatpush1.msra.mxu0 0.0
    %912 = vmatprep.subr.mxu0 0.0
    %913 = vmatpush1.msra.mxu0 0.0
    %914 = vmatprep.subr.mxu0 0.0
    %915 = vmatpush1.msra.mxu0 0.0
    %916 = vmatprep.subr.mxu0 0.0
    %917 = vmatpush1.msra.mxu0 0.0
    %918 = vmatprep.subr.mxu0 0.0
    %919 = vmatpush1.msra.mxu0 0.0
    %920 = vmatprep.subr.mxu0 0.0
    %921 = vmatpush1.msra.mxu0 0.0
    %922 = vmatprep.subr.mxu0 0.0
    %923 = vmatpush1.msra.mxu0 0.0
    %924 = vmatprep.subr.mxu0 0.0
    %925 = vmatpush1.msra.mxu0 0.0
    %926 = vmatprep.subr.mxu0 0.0
    %927 = vmatpush1.msra.mxu0 0.0
    %928 = vmatprep.subr.mxu0 0.0
    %929 = vmatpush1.msra.mxu0 0.0
    %930 = vmatprep.subr.mxu0 0.0
    %931 = vmatpush1.msra.mxu0 0.0
    %932 = vmatprep.subr.mxu0 0.0
    %933 = vmatpush1.msra.mxu0 0.0
    %934 = vmatprep.subr.mxu0 0.0
    %935 = vmatpush1.msra.mxu0 0.0
    %936 = vmatprep.subr.mxu0 0.0
    %937 = vmatpush1.msra.mxu0 0.0
    %938 = vmatprep.subr.mxu0 0.0
    %939 = vmatpush1.msra.mxu0 0.0
    %940 = vmatprep.subr.mxu0 0.0
    %941 = vmatpush1.msra.mxu0 0.0
    %942 = vmatprep.subr.mxu0 0.0
    %943 = vmatpush1.msra.mxu0 0.0
    %944 = vmatprep.subr.mxu0 0.0
    %945 = vmatpush1.msra.mxu0 0.0
    %946 = vmatprep.subr.mxu0 0.0
    %947 = vmatpush1.msra.mxu0 0.0
    %948 = vmatprep.subr.mxu0 0.0
    %949 = vmatpush1.msra.mxu0 0.0
    %950 = vmatprep.subr.mxu0 0.0
    %951 = vmatpush1.msra.mxu0 0.0
    %952 = vmatprep.subr.mxu0 0.0
    %953 = vmatpush1.msra.mxu0 0.0
    %954 = vmatprep.subr.mxu0 0.0
    %955 = vmatpush1.msra.mxu0 0.0
    %956 = vmatprep.subr.mxu0 0.0
    %957 = vmatpush1.msra.mxu0 0.0
    %958 = vmatprep.subr.mxu0 0.0
    %959 = vmatpush1.msra.mxu0 0.0
    %960 = vmatprep.subr.mxu0 0.0
    %961 = vmatpush1.msra.mxu0 0.0
    %962 = vmatprep.mubr.f32.mxu0 0.0
    %963 = vmatmul.mubr.f32.gmra.mrb[0].mxu0 %v893
    %v964 = vpop.f32.mrb[0].mxu0
    %v965 = vadd.f32 0.0, %v964
    %v966 = vpop.f32.mrb[0].mxu0
    %967 = vmatprep.mubr.f32.mxu0 0.0
    %968 = vmatmul.mubr.f32.gmra.mrb[0].mxu0 %v896
    %v969 = vpop.f32.mrb[0].mxu0
    %v970 = vadd.f32 0.0, %v969
    %v971 = vpop.f32.mrb[0].mxu0
    %972 = vdwg.mxu0
    %975 = vrot.lane.b32.xlu0 %v565, 8
    %v976 = vpop.permute.xlu0 %975
    %977 = vrot.lane.b32.xlu0 %v570, 8
    %v978 = vpop.permute.xlu0 %977
    %983 = vrot.lane.b32.xlu0 %v765, 16
    %v984 = vpop.permute.xlu0 %983
    %985 = vrot.lane.b32.xlu0 %v770, 16
    %v986 = vpop.permute.xlu0 %985
    %991 = vrot.lane.b32.xlu0 %v965, 24
    %v992 = vpop.permute.xlu0 %991
    %993 = vrot.lane.b32.xlu0 %v970, 24
    %v994 = vpop.permute.xlu0 %993
    %v997 = vsel %vm179, %v365, %v976
    %v998 = vsel %vm179, %v370, %v978
    %v999 = vsel %vm263, %v997, %v984
    %v1000 = vsel %vm263, %v998, %v986
    %vm1001 = vcmask 195584
    %v1002 = vsel %vm1001, %v999, %v992
    %v1003 = vsel %vm1001, %v1000, %v994
    %v1004 = vld [vmem:[%s4] sm:$0xff]
    %v1005 = vld [vmem:[%s4 + $0x8] sm:$0xff]
    %v1006 = vld [vmem:[%s4 + $0x10] sm:$0xff]
    %v1007 = vld [vmem:[%s4 + $0x18] sm:$0xff]
    %v1008 = vld [vmem:[%s5] sm:$0x1]
    %v1010 = vlaneseq
    %v1011 = vshrl.u32 %v1010, 7
    %v1012 = vsub.s32 0, %v1011
    %v1013 = vrot.slane %v1008, %v1012
    %v1016 = vsel %vm91, %v1002, 0
    %v1019 = vsel %vm91, %v1003, 0
    %1021 = vmatprep.subr.mxu0 0.0
    %1022 = vmatpush1.msra.mxu0 %v1004
    %1023 = vmatprep.subr.mxu0 0.0
    %1024 = vmatpush1.msra.mxu0 %v1005
    %1025 = vmatprep.subr.mxu0 0.0
    %1026 = vmatpush1.msra.mxu0 %v1006
    %1027 = vmatprep.subr.mxu0 0.0
    %1028 = vmatpush1.msra.mxu0 %v1007
    %1029 = vmatprep.subr.mxu0 0.0
    %1030 = vmatpush1.msra.mxu0 0.0
    %1031 = vmatprep.subr.mxu0 0.0
    %1032 = vmatpush1.msra.mxu0 0.0
    %1033 = vmatprep.subr.mxu0 0.0
    %1034 = vmatpush1.msra.mxu0 0.0
    %1035 = vmatprep.subr.mxu0 0.0
    %1036 = vmatpush1.msra.mxu0 0.0
    %1037 = vmatprep.subr.mxu0 0.0
    %1038 = vmatpush1.msra.mxu0 0.0
    %1039 = vmatprep.subr.mxu0 0.0
    %1040 = vmatpush1.msra.mxu0 0.0
    %1041 = vmatprep.subr.mxu0 0.0
    %1042 = vmatpush1.msra.mxu0 0.0
    %1043 = vmatprep.subr.mxu0 0.0
    %1044 = vmatpush1.msra.mxu0 0.0
    %1045 = vmatprep.subr.mxu0 0.0
    %1046 = vmatpush1.msra.mxu0 0.0
    %1047 = vmatprep.subr.mxu0 0.0
    %1048 = vmatpush1.msra.mxu0 0.0
    %1049 = vmatprep.subr.mxu0 0.0
    %1050 = vmatpush1.msra.mxu0 0.0
    %1051 = vmatprep.subr.mxu0 0.0
    %1052 = vmatpush1.msra.mxu0 0.0
    %1053 = vmatprep.subr.mxu0 0.0
    %1054 = vmatpush1.msra.mxu0 0.0
    %1055 = vmatprep.subr.mxu0 0.0
    %1056 = vmatpush1.msra.mxu0 0.0
    %1057 = vmatprep.subr.mxu0 0.0
    %1058 = vmatpush1.msra.mxu0 0.0
    %1059 = vmatprep.subr.mxu0 0.0
    %1060 = vmatpush1.msra.mxu0 0.0
    %1061 = vmatprep.subr.mxu0 0.0
    %1062 = vmatpush1.msra.mxu0 0.0
    %1063 = vmatprep.subr.mxu0 0.0
    %1064 = vmatpush1.msra.mxu0 0.0
    %1065 = vmatprep.subr.mxu0 0.0
    %1066 = vmatpush1.msra.mxu0 0.0
    %1067 = vmatprep.subr.mxu0 0.0
    %1068 = vmatpush1.msra.mxu0 0.0
    %1069 = vmatprep.subr.mxu0 0.0
    %1070 = vmatpush1.msra.mxu0 0.0
    %1071 = vmatprep.subr.mxu0 0.0
    %1072 = vmatpush1.msra.mxu0 0.0
    %1073 = vmatprep.subr.mxu0 0.0
    %1074 = vmatpush1.msra.mxu0 0.0
    %1075 = vmatprep.subr.mxu0 0.0
    %1076 = vmatpush1.msra.mxu0 0.0
    %1077 = vmatprep.subr.mxu0 0.0
    %1078 = vmatpush1.msra.mxu0 0.0
    %1079 = vmatprep.subr.mxu0 0.0
    %1080 = vmatpush1.msra.mxu0 0.0
    %1081 = vmatprep.subr.mxu0 0.0
    %1082 = vmatpush1.msra.mxu0 0.0
    %1083 = vmatprep.subr.mxu0 0.0
    %1084 = vmatpush1.msra.mxu0 0.0
    %1085 = vmatprep.mubr.f32.mxu0 0.0
    %1086 = vmatmul.mubr.f32.gmra.mrb[0].mxu0 %v1016
    %v1087 = vpop.f32.mrb[0].mxu0
    %v1088 = vadd.f32 %v1013, %v1087
    %v1089 = vpop.f32.mrb[0].mxu0
    %1090 = vmatprep.mubr.f32.mxu0 0.0
    %1091 = vmatmul.mubr.f32.gmra.mrb[0].mxu0 %v1019
    %v1092 = vpop.f32.mrb[0].mxu0
    %v1093 = vadd.f32 %v1013, %v1092
    %v1094 = vpop.f32.mrb[0].mxu0
    %1095 = vdwg.mxu0
    %v1096 = vadd.f32 %v76, %v1088
    %v1097 = vadd.f32 %v77, %v1093
    %v1098 = vsel %vm91, %v1096, 0.0
    %1099 = vadd.xlane.f32.xlu0 %v1098
    %v1100 = vpop.xlane.xlu0 %1099
    %v1101 = vsel %vm91, %v1097, 0.0
    %1102 = vadd.xlane.f32.xlu0 %v1101
    %v1103 = vpop.xlane.xlu0 %1102
    %v1104 = vrcp.pop 32.0
    %v1105 = vmul.f32 %v1100, %v1104
    %v1106 = vmul.f32 %v1103, %v1104
    %v1107 = vsub.f32 %v1096, %v1105
    %v1108 = vsub.f32 %v1097, %v1106
    %v1109 = vmul.f32 %v1107, %v1107
    %v1110 = vmul.f32 %v1108, %v1108
    %v1111 = vsel %vm91, %v1109, 0.0
    %1112 = vadd.xlane.f32.xlu0 %v1111
    %v1113 = vpop.xlane.xlu0 %1112
    %v1114 = vsel %vm91, %v1110, 0.0
    %1115 = vadd.xlane.f32.xlu0 %v1114
    %v1116 = vpop.xlane.xlu0 %1115
    %v1117 = vmul.f32 %v1113, %v1104
    %v1118 = vmul.f32 %v1116, %v1104
    %v1119 = vadd.f32 %v1117, 1e-05
    %v1120 = vadd.f32 %v1118, 1e-05
    %v1121 = vrsqrt.pop %v1119
    %v1122 = vrsqrt.pop %v1120
    %v1123 = vmul.f32 %v1107, %v1121
    %v1124 = vmul.f32 %v1108, %v1122
    %v1125 = vld [vmem:[%s6] sm:$0x1]
    %v1127 = vlaneseq
    %v1128 = vshrl.u32 %v1127, 7
    %v1129 = vsub.s32 0, %v1128
    %v1130 = vrot.slane %v1125, %v1129
    %v1132 = vmul.f32 %v1123, %v1130
    %v1133 = vmul.f32 %v1124, %v1130
    %v1134 = vld [vmem:[%s7] sm:$0x1]
    %v1136 = vlaneseq
    %v1137 = vshrl.u32 %v1136, 7
    %v1138 = vsub.s32 0, %v1137
    %v1139 = vrot.slane %v1134, %v1138
    %v1141 = vadd.f32 %v1132, %v1139
    %v1142 = vadd.f32 %v1133, %v1139
    %v1143 = vld [vmem:[%s8] sm:$0xff]
    %v1144 = vld [vmem:[%s8 + $0x8] sm:$0xff]
    %v1145 = vld [vmem:[%s8 + $0x10] sm:$0xff]
    %v1146 = vld [vmem:[%s8 + $0x18] sm:$0xff]
    %v1147 = vld [vmem:[%s9] sm:$0x1]
    %v1149 = vlaneseq
    %v1150 = vshrl.u32 %v1149, 7
    %v1151 = vsub.s32 0, %v1150
    %v1152 = vrot.slane %v1147, %v1151
    %v1155 = vsel %vm91, %v1141, 0
    %v1158 = vsel %vm91, %v1142, 0
    %1160 = vmatprep.subr.mxu0 0.0
    %1161 = vmatpush1.msra.mxu0 %v1143
    %1162 = vmatprep.subr.mxu0 0.0
    %1163 = vmatpush1.msra.mxu0 %v1144
    %1164 = vmatprep.subr.mxu0 0.0
    %1165 = vmatpush1.msra.mxu0 %v1145
    %1166 = vmatprep.subr.mxu0 0.0
    %1167 = vmatpush1.msra.mxu0 %v1146
    %1168 = vmatprep.subr.mxu0 0.0
    %1169 = vmatpush1.msra.mxu0 0.0
    %1170 = vmatprep.subr.mxu0 0.0
    %1171 = vmatpush1.msra.mxu0 0.0
    %1172 = vmatprep.subr.mxu0 0.0
    %1173 = vmatpush1.msra.mxu0 0.0
    %1174 = vmatprep.subr.mxu0 0.0
    %1175 = vmatpush1.msra.mxu0 0.0
    %1176 = vmatprep.subr.mxu0 0.0
    %1177 = vmatpush1.msra.mxu0 0.0
    %1178 = vmatprep.subr.mxu0 0.0
    %1179 = vmatpush1.msra.mxu0 0.0
    %1180 = vmatprep.subr.mxu0 0.0
    %1181 = vmatpush1.msra.mxu0 0.0
    %1182 = vmatprep.subr.mxu0 0.0
    %1183 = vmatpush1.msra.mxu0 0.0
    %1184 = vmatprep.subr.mxu0 0.0
    %1185 = vmatpush1.msra.mxu0 0.0
    %1186 = vmatprep.subr.mxu0 0.0
    %1187 = vmatpush1.msra.mxu0 0.0
    %1188 = vmatprep.subr.mxu0 0.0
    %1189 = vmatpush1.msra.mxu0 0.0
    %1190 = vmatprep.subr.mxu0 0.0
    %1191 = vmatpush1.msra.mxu0 0.0
    %1192 = vmatprep.subr.mxu0 0.0
    %1193 = vmatpush1.msra.mxu0 0.0
    %1194 = vmatprep.subr.mxu0 0.0
    %1195 = vmatpush1.msra.mxu0 0.0
    %1196 = vmatprep.subr.mxu0 0.0
    %1197 = vmatpush1.msra.mxu0 0.0
    %1198 = vmatprep.subr.mxu0 0.0
    %1199 = vmatpush1.msra.mxu0 0.0
    %1200 = vmatprep.subr.mxu0 0.0
    %1201 = vmatpush1.msra.mxu0 0.0
    %1202 = vmatprep.subr.mxu0 0.0
    %1203 = vmatpush1.msra.mxu0 0.0
    %1204 = vmatprep.subr.mxu0 0.0
    %1205 = vmatpush1.msra.mxu0 0.0
    %1206 = vmatprep.subr.mxu0 0.0
    %1207 = vmatpush1.msra.mxu0 0.0
    %1208 = vmatprep.subr.mxu0 0.0
    %1209 = vmatpush1.msra.mxu0 0.0
    %1210 = vmatprep.subr.mxu0 0.0
    %1211 = vmatpush1.msra.mxu0 0.0
    %1212 = vmatprep.subr.mxu0 0.0
    %1213 = vmatpush1.msra.mxu0 0.0
    %1214 = vmatprep.subr.mxu0 0.0
    %1215 = vmatpush1.msra.mxu0 0.0
    %1216 = vmatprep.subr.mxu0 0.0
    %1217 = vmatpush1.msra.mxu0 0.0
    %1218 = vmatprep.subr.mxu0 0.0
    %1219 = vmatpush1.msra.mxu0 0.0
    %1220 = vmatprep.subr.mxu0 0.0
    %1221 = vmatpush1.msra.mxu0 0.0
    %1222 = vmatprep.subr.mxu0 0.0
    %1223 = vmatpush1.msra.mxu0 0.0
    %1224 = vmatprep.mubr.f32.mxu0 0.0
    %1225 = vmatmul.mubr.f32.gmra.mrb[0].mxu0 %v1155
    %v1226 = vpop.f32.mrb[0].mxu0
    %v1227 = vadd.f32 %v1152, %v1226
    %v1228 = vpop.f32.mrb[0].mxu0
    %1229 = vmatprep.mubr.f32.mxu0 0.0
    %1230 = vmatmul.mubr.f32.gmra.mrb[0].mxu0 %v1158
    %v1231 = vpop.f32.mrb[0].mxu0
    %v1232 = vadd.f32 %v1152, %v1231
    %v1233 = vpop.f32.mrb[0].mxu0
    %1234 = vdwg.mxu0
    %v1235 = vmax.f32 %v1227, 0.0
    %v1236 = vmax.f32 %v1232, 0.0
    %v1237 = vld [vmem:[%s10] sm:$0xff]
    %v1238 = vld [vmem:[%s10 + $0x8] sm:$0xff]
    %v1239 = vld [vmem:[%s10 + $0x10] sm:$0xff]
    %v1240 = vld [vmem:[%s10 + $0x18] sm:$0xff]
    %v1241 = vld [vmem:[%s10 + $0x20] sm:$0xff]
    %v1242 = vld [vmem:[%s10 + $0x28] sm:$0xff]
    %v1243 = vld [vmem:[%s10 + $0x30] sm:$0xff]
    %v1244 = vld [vmem:[%s10 + $0x38] sm:$0xff]
    %v1245 = vld [vmem:[%s11] sm:$0x1]
    %v1247 = vlaneseq
    %v1248 = vshrl.u32 %v1247, 7
    %v1249 = vsub.s32 0, %v1248
    %v1250 = vrot.slane %v1245, %v1249
    %vm1252 = vcmask 523264
    %v1254 = vsel %vm1252, %v1235, 0
    %v1257 = vsel %vm1252, %v1236, 0
    %1259 = vmatprep.subr.mxu0 0.0
    %1260 = vmatpush1.msra.mxu0 %v1237
    %1261 = vmatprep.subr.mxu0 0.0
    %1262 = vmatpush1.msra.mxu0 %v1238
    %1263 = vmatprep.subr.mxu0 0.0
    %1264 = vmatpush1.msra.mxu0 %v1239
    %1265 = vmatprep.subr.mxu0 0.0
    %1266 = vmatpush1.msra.mxu0 %v1240
    %1267 = vmatprep.subr.mxu0 0.0
    %1268 = vmatpush1.msra.mxu0 %v1241
    %1269 = vmatprep.subr.mxu0 0.0
    %1270 = vmatpush1.msra.mxu0 %v1242
    %1271 = vmatprep.subr.mxu0 0.0
    %1272 = vmatpush1.msra.mxu0 %v1243
    %1273 = vmatprep.subr.mxu0 0.0
    %1274 = vmatpush1.msra.mxu0 %v1244
    %1275 = vmatprep.subr.mxu0 0.0
    %1276 = vmatpush1.msra.mxu0 0.0
    %1277 = vmatprep.subr.mxu0 0.0
    %1278 = vmatpush1.msra.mxu0 0.0
    %1279 = vmatprep.subr.mxu0 0.0
    %1280 = vmatpush1.msra.mxu0 0.0
    %1281 = vmatprep.subr.mxu0 0.0
    %1282 = vmatpush1.msra.mxu0 0.0
    %1283 = vmatprep.subr.mxu0 0.0
    %1284 = vmatpush1.msra.mxu0 0.0
    %1285 = vmatprep.subr.mxu0 0.0
    %1286 = vmatpush1.msra.mxu0 0.0
    %1287 = vmatprep.subr.mxu0 0.0
    %1288 = vmatpush1.msra.mxu0 0.0
    %1289 = vmatprep.subr.mxu0 0.0
    %1290 = vmatpush1.msra.mxu0 0.0
    %1291 = vmatprep.subr.mxu0 0.0
    %1292 = vmatpush1.msra.mxu0 0.0
    %1293 = vmatprep.subr.mxu0 0.0
    %1294 = vmatpush1.msra.mxu0 0.0
    %1295 = vmatprep.subr.mxu0 0.0
    %1296 = vmatpush1.msra.mxu0 0.0
    %1297 = vmatprep.subr.mxu0 0.0
    %1298 = vmatpush1.msra.mxu0 0.0
    %1299 = vmatprep.subr.mxu0 0.0
    %1300 = vmatpush1.msra.mxu0 0.0
    %1301 = vmatprep.subr.mxu0 0.0
    %1302 = vmatpush1.msra.mxu0 0.0
    %1303 = vmatprep.subr.mxu0 0.0
    %1304 = vmatpush1.msra.mxu0 0.0
    %1305 = vmatprep.subr.mxu0 0.0
    %1306 = vmatpush1.msra.mxu0 0.0
    %1307 = vmatprep.subr.mxu0 0.0
    %1308 = vmatpush1.msra.mxu0 0.0
    %1309 = vmatprep.subr.mxu0 0.0
    %1310 = vmatpush1.msra.mxu0 0.0
    %1311 = vmatprep.subr.mxu0 0.0
    %1312 = vmatpush1.msra.mxu0 0.0
    %1313 = vmatprep.subr.mxu0 0.0
    %1314 = vmatpush1.msra.mxu0 0.0
    %1315 = vmatprep.subr.mxu0 0.0
    %1316 = vmatpush1.msra.mxu0 0.0
    %1317 = vmatprep.subr.mxu0 0.0
    %1318 = vmatpush1.msra.mxu0 0.0
    %1319 = vmatprep.subr.mxu0 0.0
    %1320 = vmatpush1.msra.mxu0 0.0
    %1321 = vmatprep.subr.mxu0 0.0
    %1322 = vmatpush1.msra.mxu0 0.0
    %1323 = vmatprep.mubr.f32.mxu0 0.0
    %1324 = vmatmul.mubr.f32.gmra.mrb[0].mxu0 %v1254
    %v1325 = vpop.f32.mrb[0].mxu0
    %v1326 = vadd.f32 %v1250, %v1325
    %v1327 = vpop.f32.mrb[0].mxu0
    %1328 = vmatprep.mubr.f32.mxu0 0.0
    %1329 = vmatmul.mubr.f32.gmra.mrb[0].mxu0 %v1257
    %v1330 = vpop.f32.mrb[0].mxu0
    %v1331 = vadd.f32 %v1250, %v1330
    %v1332 = vpop.f32.mrb[0].mxu0
    %1333 = vdwg.mxu0
    %v1334 = vadd.f32 %v1141, %v1326
    %v1335 = vadd.f32 %v1142, %v1331
    %v1336 = vsel %vm91, %v1334, 0.0
    %1337 = vadd.xlane.f32.xlu0 %v1336
    %v1338 = vpop.xlane.xlu0 %1337
    %v1339 = vsel %vm91, %v1335, 0.0
    %1340 = vadd.xlane.f32.xlu0 %v1339
    %v1341 = vpop.xlane.xlu0 %1340
    %v1342 = vmul.f32 %v1338, %v1104
    %v1343 = vmul.f32 %v1341, %v1104
    %v1344 = vsub.f32 %v1334, %v1342
    %v1345 = vsub.f32 %v1335, %v1343
    %v1346 = vmul.f32 %v1344, %v1344
    %v1347 = vmul.f32 %v1345, %v1345
    %v1348 = vsel %vm91, %v1346, 0.0
    %1349 = vadd.xlane.f32.xlu0 %v1348
    %v1350 = vpop.xlane.xlu0 %1349
    %v1351 = vsel %vm91, %v1347, 0.0
    %1352 = vadd.xlane.f32.xlu0 %v1351
    %v1353 = vpop.xlane.xlu0 %1352
    %v1354 = vmul.f32 %v1350, %v1104
    %v1355 = vmul.f32 %v1353, %v1104
    %v1356 = vadd.f32 %v1354, 1e-05
    %v1357 = vadd.f32 %v1355, 1e-05
    %v1358 = vrsqrt.pop %v1356
    %v1359 = vrsqrt.pop %v1357
    %v1360 = vmul.f32 %v1344, %v1358
    %v1361 = vmul.f32 %v1345, %v1359
    %v1362 = vld [vmem:[%s12] sm:$0x1]
    %v1364 = vlaneseq
    %v1365 = vshrl.u32 %v1364, 7
    %v1366 = vsub.s32 0, %v1365
    %v1367 = vrot.slane %v1362, %v1366
    %v1369 = vmul.f32 %v1360, %v1367
    %v1370 = vmul.f32 %v1361, %v1367
    %v1371 = vld [vmem:[%s13] sm:$0x1]
    %v1373 = vlaneseq
    %v1374 = vshrl.u32 %v1373, 7
    %v1375 = vsub.s32 0, %v1374
    %v1376 = vrot.slane %v1371, %v1375
    %v1378 = vadd.f32 %v1369, %v1376
    %v1379 = vadd.f32 %v1370, %v1376
    %1380 = vst.msk [vmem:[#allocation7] sm:$0xff] %vm91, %v1378
    %1381 = vst.msk [vmem:[#allocation7 + $0x8] sm:$0xff] %vm91, %v1379
    // Predicated region
    $region66: #{tpu_custom_call.1} parent=1 // pred_check
      _
    $region67: #{tpu_custom_call.1} parent=1 // pred_check_branch
      %1383 = sbr.rel (0) target = $region69
    $region68: #{tpu_custom_call.1} parent=1 // pred_region
      %s1385 = ssub.s32 256, 256
      %1386 = vsyncadd [#allocation4], %s1385
      %s1387 = sshll.u32 [#allocation7], 4
      %s1388 = int_to_ptr.vmem [resolvable:$true] %s1387
      %1393 = dma.vmem_to_hbm [thread:$0]  %s1388, 256, %s14, [#allocation4], 128, 128, 8
    $region69: #{tpu_custom_call.1} parent=1 // pred_fallthru
      _
    // Predicated region
    $region70: #{tpu_custom_call.1} parent=1 // pred_check
      _
    $region71: #{tpu_custom_call.1} parent=1 // pred_check_branch
      %1395 = sbr.rel (0) target = $region73
    $region72: #{tpu_custom_call.1} parent=1 // pred_region
      %1396 = dma.done [#allocation4], 256
    $region73: #{tpu_custom_call.1} parent=1 // pred_fallthru
      _
    %1397 = vsyncpa [#allocation3], 1
    %1398 = vsyncpa [#allocation6], 1
    %1399 = vsyncpa [#allocation4], 1

</llo_original>
